<compile_context>
chip_gen: v5e
topology: v5e:2x2
jax: 0.10.0
libtpu: 0.0.40
codegen_flags: <defaults>
</compile_context>

<pallas_src>
import functools

import jax
import jax.numpy as jnp
from jax.experimental import pallas as pl
from jax.experimental.pallas import tpu as pltpu


def _round_up(v, m):
    return ((v + m - 1) // m) * m


def _attention_kernel(x_ref, wqkv_ref, wo_ref, o_ref, *,
                      scale, heads, dim_head, n, dim, tb):
    """Fused multi-head self-attention for `tb` (batch*patch) slabs.

    x_ref    : (tb*n, dim)      bf16  tokens of tb slabs, flattened
    wqkv_ref : (dim, 3*inner)   bf16  fused Q|K|V projection (resident)
    wo_ref   : (inner, dim)     bf16  output projection      (resident)
    o_ref    : (tb*n, dim)      output dtype
    """
    inner = heads * dim_head

    x = x_ref[...]
    wqkv = wqkv_ref[...]
    wo = wo_ref[...]

    # One wide MXU matmul for Q, K and V of every head: (tb*n, 3*inner), f32 acc.
    qkv = jnp.dot(x, wqkv, preferred_element_type=jnp.float32)

    head_outs = []
    # Statically unrolled head loop (LLO can interleave head h+1 MXU pushes
    # under head h's softmax VPU/EUP work).
    for h in range(heads):
        lo = h * dim_head
        qh = qkv[:, lo:lo + dim_head].astype(jnp.bfloat16).reshape(tb, n, dim_head)
        kh = qkv[:, inner + lo:inner + lo + dim_head].astype(jnp.bfloat16).reshape(tb, n, dim_head)
        vh = qkv[:, 2 * inner + lo:2 * inner + lo + dim_head].astype(jnp.bfloat16).reshape(tb, n, dim_head)

        # Batched Q.K^T without an explicit transpose (contract the last axes).
        s = jnp.einsum('bqd,bkd->bqk', qh, kh,
                       preferred_element_type=jnp.float32) * scale      # (tb, n, n) f32
        s = s - jnp.max(s, axis=-1, keepdims=True)                      # stable softmax, f32
        e = jnp.exp(s)
        p = e * pl.reciprocal(jnp.sum(e, axis=-1, keepdims=True), approx=True)

        oh = jnp.einsum('bqk,bkd->bqd', p.astype(jnp.bfloat16), vh,
                        preferred_element_type=jnp.float32)             # (tb, n, dh) f32
        head_outs.append(oh.reshape(tb * n, dim_head))

    # Concatenate heads -> one wide output projection (K = inner, not dim_head).
    out = jnp.concatenate(head_outs, axis=-1).astype(jnp.bfloat16)       # (tb*n, inner)
    y = jnp.dot(out, wo, preferred_element_type=jnp.float32)             # (tb*n, dim)
    o_ref[...] = y.astype(o_ref.dtype)


def attention_pallas(x, w_qkv, w_out, *, heads, dim_head, tb_max=128):
    """x: (b, p, n, dim). w_qkv: (3*inner, dim) (PyTorch layout). w_out: (dim, inner)."""
    b, p, n, dim = x.shape
    inner = heads * dim_head
    scale = dim_head ** (-0.5)
    out_dtype = x.dtype

    # PyTorch Linear: y = x @ W.T  -> work with W.T; cast weights to bf16 once.
    wqkv_t = jnp.asarray(w_qkv).T.astype(jnp.bfloat16)      # (dim, 3*inner)
    wo_t = jnp.asarray(w_out).T.astype(jnp.bfloat16)        # (inner, dim)

    BP = b * p
    # TB slabs per grid step; TB is a multiple of 8 so block shapes stay aligned.
    TB = min(_round_up(BP, 8), max(8, _round_up(tb_max, 8)))
    BPpad = _round_up(BP, TB)

    xf = x.reshape(BP, n, dim)
    if BPpad != BP:
        pad = jnp.zeros((BPpad - BP, n, dim), dtype=x.dtype)
        xf = jnp.concatenate([xf, pad], axis=0)
    x2d = xf.reshape(BPpad * n, dim).astype(jnp.bfloat16)   # tokens flattened

    kernel = functools.partial(
        _attention_kernel, scale=scale, heads=heads,
        dim_head=dim_head, n=n, dim=dim, tb=TB)

    flops = (2 * BP * n * dim * 3 * inner          # fused QKV projection
             + 4 * BP * heads * n * n * dim_head   # scores + attn @ V
             + 2 * BP * n * inner * dim)           # output projection
    cost = pl.CostEstimate(
        flops=int(flops),
        transcendentals=int(BP * heads * n * n),
        bytes_accessed=int(x2d.size * 2 + wqkv_t.size * 2 + wo_t.size * 2
                           + BPpad * n * dim * jnp.dtype(out_dtype).itemsize),
    )

    out = pl.pallas_call(
        kernel,
        out_shape=jax.ShapeDtypeStruct((BPpad * n, dim), out_dtype),
        grid_spec=pltpu.PrefetchScalarGridSpec(
            num_scalar_prefetch=0,
            grid=(BPpad // TB,),
            in_specs=[
                pl.BlockSpec((TB * n, dim), lambda i: (i, 0)),       # TB slabs of tokens
                pl.BlockSpec((dim, 3 * inner), lambda i: (0, 0)),    # Wqkv, resident
                pl.BlockSpec((inner, dim), lambda i: (0, 0)),        # Wo, resident
            ],
            out_specs=pl.BlockSpec((TB * n, dim), lambda i: (i, 0)),
        ),
        compiler_params=pltpu.CompilerParams(
            dimension_semantics=("parallel",)),
        cost_estimate=cost,
    )(x2d, wqkv_t, wo_t)

    return out[:BP * n].reshape(b, p, n, dim)


def attention_reference(x, w_qkv, w_out, *, heads, dim_head):
    """Pure-JAX f32 reference matching the PyTorch forward (dropout=0 / eval)."""
    b, p, n, dim = x.shape
    inner = heads * dim_head
    scale = dim_head ** (-0.5)
    qkv = jnp.einsum('bpnd,od->bpno', x, w_qkv)            # (b,p,n,3*inner)
    q, k, v = jnp.split(qkv, 3, axis=-1)

    def split_heads(t):  # 'b p n (h d) -> b p h n d'
        return t.reshape(b, p, n, heads, dim_head).transpose(0, 1, 3, 2, 4)

    q, k, v = map(split_heads, (q, k, v))
    dots = jnp.einsum('bphnd,bphmd->bphnm', q, k) * scale
    attn = jax.nn.softmax(dots, axis=-1)
    out = jnp.einsum('bphnm,bphmd->bphnd', attn, v)
    out = out.transpose(0, 1, 3, 2, 4).reshape(b, p, n, inner)
    return jnp.einsum('bpni,oi->bpno', out, w_out)


if __name__ == "__main__":
    # Small shapes consistent with the module's forward: x is (b, p, n, dim)
    b, p, n, dim = 2, 2, 8, 32
    heads, dim_head = 4, 16
    inner = heads * dim_head

    key = jax.random.PRNGKey(0)
    kx, kqkv, kout = jax.random.split(key, 3)
    x = jax.random.normal(kx, (b, p, n, dim), dtype=jnp.float32)
    # PyTorch Linear layout: (out_features, in_features)
    w_qkv = jax.random.normal(kqkv, (3 * inner, dim), dtype=jnp.float32) * 0.05
    w_out = jax.random.normal(kout, (dim, inner), dtype=jnp.float32) * 0.05
    # TODO(synk): dropout in to_out is a no-op here (dropout=0.0 / eval mode).

    y = attention_pallas(x, w_qkv, w_out, heads=heads, dim_head=dim_head)
    y = jax.block_until_ready(y)

    y_ref = attention_reference(x, w_qkv, w_out, heads=heads, dim_head=dim_head)
    max_err = float(jnp.max(jnp.abs(y - y_ref)))
    # bf16 matmul operands (f32 accumulation/softmax) -> tolerance-level deltas.
    assert jnp.allclose(y, y_ref, atol=3e-2, rtol=3e-2), max_err

    print("KERNEL_OK")
</pallas_src>

<mosaic_0001>
module attributes {stable_mosaic.version = 11 : i64} {
  func.func @_attention_kernel(%arg0: i32, %arg1: memref<64x32xbf16, #tpu.memory_space<vmem>>, %arg2: memref<32x192xbf16, #tpu.memory_space<vmem>>, %arg3: memref<64x32xbf16, #tpu.memory_space<vmem>>, %arg4: memref<64x32xf32, #tpu.memory_space<vmem>>) attributes {dimension_semantics = [#tpu.dimension_semantics<parallel>], iteration_bounds = array<i64: 1>, scalar_prefetch = 0 : i64, scratch_operands = 0 : i64, tpu.core_type = #tpu.core_type<tc>, window_params = [{transform_indices = @transform_0, window_bounds = array<i64: 64, 32>}, {pipeline_mode = #tpu.pipeline_mode<synchronous>, transform_indices = @transform_1, window_bounds = array<i64: 32, 192>}, {pipeline_mode = #tpu.pipeline_mode<synchronous>, transform_indices = @transform_2, window_bounds = array<i64: 64, 32>}, {transform_indices = @transform_3, window_bounds = array<i64: 64, 32>}]} {
    %c0 = arith.constant 0 : index
    %c0_0 = arith.constant 0 : index
    %0 = vector.load %arg1[%c0, %c0_0] : memref<64x32xbf16, #tpu.memory_space<vmem>>, vector<64x32xbf16>
    %c0_1 = arith.constant 0 : index
    %c0_2 = arith.constant 0 : index
    %1 = vector.load %arg2[%c0_1, %c0_2] : memref<32x192xbf16, #tpu.memory_space<vmem>>, vector<32x192xbf16>
    %c0_3 = arith.constant 0 : index
    %c0_4 = arith.constant 0 : index
    %2 = vector.load %arg3[%c0_3, %c0_4] : memref<64x32xbf16, #tpu.memory_space<vmem>>, vector<64x32xbf16>
    %cst = arith.constant dense<0.000000e+00> : vector<64x192xf32>
    %3 = tpu.matmul %0, %1, %cst {dimension_numbers = #tpu.dot_dimension_numbers<[1], [0], [0], [1], [0, 0, 1, 1], [], []>} : vector<64x32xbf16>, vector<32x192xbf16>, vector<64x192xf32> -> vector<64x192xf32>
    %4 = vector.extract_strided_slice %3 {offsets = [0, 0], sizes = [64, 16], strides = [1, 1]} : vector<64x192xf32> to vector<64x16xf32>
    %5 = arith.truncf %4 : vector<64x16xf32> to vector<64x16xbf16>
    %6 = vector.shape_cast %5 : vector<64x16xbf16> to vector<8x8x16xbf16>
    %7 = vector.extract_strided_slice %3 {offsets = [0, 64], sizes = [64, 16], strides = [1, 1]} : vector<64x192xf32> to vector<64x16xf32>
    %8 = arith.truncf %7 : vector<64x16xf32> to vector<64x16xbf16>
    %9 = vector.shape_cast %8 : vector<64x16xbf16> to vector<8x8x16xbf16>
    %10 = vector.extract_strided_slice %3 {offsets = [0, 128], sizes = [64, 16], strides = [1, 1]} : vector<64x192xf32> to vector<64x16xf32>
    %11 = arith.truncf %10 : vector<64x16xf32> to vector<64x16xbf16>
    %12 = vector.shape_cast %11 : vector<64x16xbf16> to vector<8x8x16xbf16>
    "tpu.trace_start"() <{level = 10 : i32, message = "bqd,bkd->bqk"}> : () -> ()
    %cst_5 = arith.constant dense<0.000000e+00> : vector<8x8x8xf32>
    %13 = tpu.matmul %6, %9, %cst_5 {dimension_numbers = #tpu.dot_dimension_numbers<[2], [2], [1], [1], [0, 0, 0, 1, 1, 1], [0], [0]>} : vector<8x8x16xbf16>, vector<8x8x16xbf16>, vector<8x8x8xf32> -> vector<8x8x8xf32>
    "tpu.trace_stop"() : () -> ()
    %cst_6 = arith.constant 2.500000e-01 : f32
    %14 = vector.broadcast %cst_6 : f32 to vector<8x8x8xf32>
    %15 = arith.mulf %13, %14 : vector<8x8x8xf32>
    %cst_7 = arith.constant dense<0xFF800000> : vector<8x8xf32>
    %16 = vector.multi_reduction <maximumf>, %15, %cst_7 [2] : vector<8x8x8xf32> to vector<8x8xf32>
    %17 = vector.shape_cast %16 : vector<8x8xf32> to vector<8x8x1xf32>
    %18 = vector.broadcast %17 : vector<8x8x1xf32> to vector<8x8x8xf32>
    %19 = arith.subf %15, %18 : vector<8x8x8xf32>
    %20 = math.exp %19 : vector<8x8x8xf32>
    %cst_8 = arith.constant dense<0.000000e+00> : vector<8x8xf32>
    %21 = vector.multi_reduction <add>, %20, %cst_8 [2] : vector<8x8x8xf32> to vector<8x8xf32>
    %22 = vector.shape_cast %21 : vector<8x8xf32> to vector<8x8x1xf32>
    %23 = tpu.reciprocal %22 {approx = true} : vector<8x8x1xf32> -> vector<8x8x1xf32>
    %24 = vector.broadcast %23 : vector<8x8x1xf32> to vector<8x8x8xf32>
    %25 = arith.mulf %20, %24 : vector<8x8x8xf32>
    %26 = arith.truncf %25 : vector<8x8x8xf32> to vector<8x8x8xbf16>
    "tpu.trace_start"() <{level = 10 : i32, message = "bqk,bkd->bqd"}> : () -> ()
    %cst_9 = arith.constant dense<0.000000e+00> : vector<8x8x16xf32>
    %27 = tpu.matmul %26, %12, %cst_9 {dimension_numbers = #tpu.dot_dimension_numbers<[2], [1], [1], [2], [0, 0, 0, 1, 1, 2], [0], [0]>} : vector<8x8x8xbf16>, vector<8x8x16xbf16>, vector<8x8x16xf32> -> vector<8x8x16xf32>
    "tpu.trace_stop"() : () -> ()
    %28 = vector.shape_cast %27 : vector<8x8x16xf32> to vector<64x16xf32>
    %29 = vector.extract_strided_slice %3 {offsets = [0, 16], sizes = [64, 16], strides = [1, 1]} : vector<64x192xf32> to vector<64x16xf32>
    %30 = arith.truncf %29 : vector<64x16xf32> to vector<64x16xbf16>
    %31 = vector.shape_cast %30 : vector<64x16xbf16> to vector<8x8x16xbf16>
    %32 = vector.extract_strided_slice %3 {offsets = [0, 80], sizes = [64, 16], strides = [1, 1]} : vector<64x192xf32> to vector<64x16xf32>
    %33 = arith.truncf %32 : vector<64x16xf32> to vector<64x16xbf16>
    %34 = vector.shape_cast %33 : vector<64x16xbf16> to vector<8x8x16xbf16>
    %35 = vector.extract_strided_slice %3 {offsets = [0, 144], sizes = [64, 16], strides = [1, 1]} : vector<64x192xf32> to vector<64x16xf32>
    %36 = arith.truncf %35 : vector<64x16xf32> to vector<64x16xbf16>
    %37 = vector.shape_cast %36 : vector<64x16xbf16> to vector<8x8x16xbf16>
    "tpu.trace_start"() <{level = 10 : i32, message = "bqd,bkd->bqk"}> : () -> ()
    %cst_10 = arith.constant dense<0.000000e+00> : vector<8x8x8xf32>
    %38 = tpu.matmul %31, %34, %cst_10 {dimension_numbers = #tpu.dot_dimension_numbers<[2], [2], [1], [1], [0, 0, 0, 1, 1, 1], [0], [0]>} : vector<8x8x16xbf16>, vector<8x8x16xbf16>, vector<8x8x8xf32> -> vector<8x8x8xf32>
    "tpu.trace_stop"() : () -> ()
    %cst_11 = arith.constant 2.500000e-01 : f32
    %39 = vector.broadcast %cst_11 : f32 to vector<8x8x8xf32>
    %40 = arith.mulf %38, %39 : vector<8x8x8xf32>
    %cst_12 = arith.constant dense<0xFF800000> : vector<8x8xf32>
    %41 = vector.multi_reduction <maximumf>, %40, %cst_12 [2] : vector<8x8x8xf32> to vector<8x8xf32>
    %42 = vector.shape_cast %41 : vector<8x8xf32> to vector<8x8x1xf32>
    %43 = vector.broadcast %42 : vector<8x8x1xf32> to vector<8x8x8xf32>
    %44 = arith.subf %40, %43 : vector<8x8x8xf32>
    %45 = math.exp %44 : vector<8x8x8xf32>
    %cst_13 = arith.constant dense<0.000000e+00> : vector<8x8xf32>
    %46 = vector.multi_reduction <add>, %45, %cst_13 [2] : vector<8x8x8xf32> to vector<8x8xf32>
    %47 = vector.shape_cast %46 : vector<8x8xf32> to vector<8x8x1xf32>
    %48 = tpu.reciprocal %47 {approx = true} : vector<8x8x1xf32> -> vector<8x8x1xf32>
    %49 = vector.broadcast %48 : vector<8x8x1xf32> to vector<8x8x8xf32>
    %50 = arith.mulf %45, %49 : vector<8x8x8xf32>
    %51 = arith.truncf %50 : vector<8x8x8xf32> to vector<8x8x8xbf16>
    "tpu.trace_start"() <{level = 10 : i32, message = "bqk,bkd->bqd"}> : () -> ()
    %cst_14 = arith.constant dense<0.000000e+00> : vector<8x8x16xf32>
    %52 = tpu.matmul %51, %37, %cst_14 {dimension_numbers = #tpu.dot_dimension_numbers<[2], [1], [1], [2], [0, 0, 0, 1, 1, 2], [0], [0]>} : vector<8x8x8xbf16>, vector<8x8x16xbf16>, vector<8x8x16xf32> -> vector<8x8x16xf32>
    "tpu.trace_stop"() : () -> ()
    %53 = vector.shape_cast %52 : vector<8x8x16xf32> to vector<64x16xf32>
    %54 = vector.extract_strided_slice %3 {offsets = [0, 32], sizes = [64, 16], strides = [1, 1]} : vector<64x192xf32> to vector<64x16xf32>
    %55 = arith.truncf %54 : vector<64x16xf32> to vector<64x16xbf16>
    %56 = vector.shape_cast %55 : vector<64x16xbf16> to vector<8x8x16xbf16>
    %57 = vector.extract_strided_slice %3 {offsets = [0, 96], sizes = [64, 16], strides = [1, 1]} : vector<64x192xf32> to vector<64x16xf32>
    %58 = arith.truncf %57 : vector<64x16xf32> to vector<64x16xbf16>
    %59 = vector.shape_cast %58 : vector<64x16xbf16> to vector<8x8x16xbf16>
    %60 = vector.extract_strided_slice %3 {offsets = [0, 160], sizes = [64, 16], strides = [1, 1]} : vector<64x192xf32> to vector<64x16xf32>
    %61 = arith.truncf %60 : vector<64x16xf32> to vector<64x16xbf16>
    %62 = vector.shape_cast %61 : vector<64x16xbf16> to vector<8x8x16xbf16>
    "tpu.trace_start"() <{level = 10 : i32, message = "bqd,bkd->bqk"}> : () -> ()
    %cst_15 = arith.constant dense<0.000000e+00> : vector<8x8x8xf32>
    %63 = tpu.matmul %56, %59, %cst_15 {dimension_numbers = #tpu.dot_dimension_numbers<[2], [2], [1], [1], [0, 0, 0, 1, 1, 1], [0], [0]>} : vector<8x8x16xbf16>, vector<8x8x16xbf16>, vector<8x8x8xf32> -> vector<8x8x8xf32>
    "tpu.trace_stop"() : () -> ()
    %cst_16 = arith.constant 2.500000e-01 : f32
    %64 = vector.broadcast %cst_16 : f32 to vector<8x8x8xf32>
    %65 = arith.mulf %63, %64 : vector<8x8x8xf32>
    %cst_17 = arith.constant dense<0xFF800000> : vector<8x8xf32>
    %66 = vector.multi_reduction <maximumf>, %65, %cst_17 [2] : vector<8x8x8xf32> to vector<8x8xf32>
    %67 = vector.shape_cast %66 : vector<8x8xf32> to vector<8x8x1xf32>
    %68 = vector.broadcast %67 : vector<8x8x1xf32> to vector<8x8x8xf32>
    %69 = arith.subf %65, %68 : vector<8x8x8xf32>
    %70 = math.exp %69 : vector<8x8x8xf32>
    %cst_18 = arith.constant dense<0.000000e+00> : vector<8x8xf32>
    %71 = vector.multi_reduction <add>, %70, %cst_18 [2] : vector<8x8x8xf32> to vector<8x8xf32>
    %72 = vector.shape_cast %71 : vector<8x8xf32> to vector<8x8x1xf32>
    %73 = tpu.reciprocal %72 {approx = true} : vector<8x8x1xf32> -> vector<8x8x1xf32>
    %74 = vector.broadcast %73 : vector<8x8x1xf32> to vector<8x8x8xf32>
    %75 = arith.mulf %70, %74 : vector<8x8x8xf32>
    %76 = arith.truncf %75 : vector<8x8x8xf32> to vector<8x8x8xbf16>
    "tpu.trace_start"() <{level = 10 : i32, message = "bqk,bkd->bqd"}> : () -> ()
    %cst_19 = arith.constant dense<0.000000e+00> : vector<8x8x16xf32>
    %77 = tpu.matmul %76, %62, %cst_19 {dimension_numbers = #tpu.dot_dimension_numbers<[2], [1], [1], [2], [0, 0, 0, 1, 1, 2], [0], [0]>} : vector<8x8x8xbf16>, vector<8x8x16xbf16>, vector<8x8x16xf32> -> vector<8x8x16xf32>
    "tpu.trace_stop"() : () -> ()
    %78 = vector.shape_cast %77 : vector<8x8x16xf32> to vector<64x16xf32>
    %79 = vector.extract_strided_slice %3 {offsets = [0, 48], sizes = [64, 16], strides = [1, 1]} : vector<64x192xf32> to vector<64x16xf32>
    %80 = arith.truncf %79 : vector<64x16xf32> to vector<64x16xbf16>
    %81 = vector.shape_cast %80 : vector<64x16xbf16> to vector<8x8x16xbf16>
    %82 = vector.extract_strided_slice %3 {offsets = [0, 112], sizes = [64, 16], strides = [1, 1]} : vector<64x192xf32> to vector<64x16xf32>
    %83 = arith.truncf %82 : vector<64x16xf32> to vector<64x16xbf16>
    %84 = vector.shape_cast %83 : vector<64x16xbf16> to vector<8x8x16xbf16>
    %85 = vector.extract_strided_slice %3 {offsets = [0, 176], sizes = [64, 16], strides = [1, 1]} : vector<64x192xf32> to vector<64x16xf32>
    %86 = arith.truncf %85 : vector<64x16xf32> to vector<64x16xbf16>
    %87 = vector.shape_cast %86 : vector<64x16xbf16> to vector<8x8x16xbf16>
    "tpu.trace_start"() <{level = 10 : i32, message = "bqd,bkd->bqk"}> : () -> ()
    %cst_20 = arith.constant dense<0.000000e+00> : vector<8x8x8xf32>
    %88 = tpu.matmul %81, %84, %cst_20 {dimension_numbers = #tpu.dot_dimension_numbers<[2], [2], [1], [1], [0, 0, 0, 1, 1, 1], [0], [0]>} : vector<8x8x16xbf16>, vector<8x8x16xbf16>, vector<8x8x8xf32> -> vector<8x8x8xf32>
    "tpu.trace_stop"() : () -> ()
    %cst_21 = arith.constant 2.500000e-01 : f32
    %89 = vector.broadcast %cst_21 : f32 to vector<8x8x8xf32>
    %90 = arith.mulf %88, %89 : vector<8x8x8xf32>
    %cst_22 = arith.constant dense<0xFF800000> : vector<8x8xf32>
    %91 = vector.multi_reduction <maximumf>, %90, %cst_22 [2] : vector<8x8x8xf32> to vector<8x8xf32>
    %92 = vector.shape_cast %91 : vector<8x8xf32> to vector<8x8x1xf32>
    %93 = vector.broadcast %92 : vector<8x8x1xf32> to vector<8x8x8xf32>
    %94 = arith.subf %90, %93 : vector<8x8x8xf32>
    %95 = math.exp %94 : vector<8x8x8xf32>
    %cst_23 = arith.constant dense<0.000000e+00> : vector<8x8xf32>
    %96 = vector.multi_reduction <add>, %95, %cst_23 [2] : vector<8x8x8xf32> to vector<8x8xf32>
    %97 = vector.shape_cast %96 : vector<8x8xf32> to vector<8x8x1xf32>
    %98 = tpu.reciprocal %97 {approx = true} : vector<8x8x1xf32> -> vector<8x8x1xf32>
    %99 = vector.broadcast %98 : vector<8x8x1xf32> to vector<8x8x8xf32>
    %100 = arith.mulf %95, %99 : vector<8x8x8xf32>
    %101 = arith.truncf %100 : vector<8x8x8xf32> to vector<8x8x8xbf16>
    "tpu.trace_start"() <{level = 10 : i32, message = "bqk,bkd->bqd"}> : () -> ()
    %cst_24 = arith.constant dense<0.000000e+00> : vector<8x8x16xf32>
    %102 = tpu.matmul %101, %87, %cst_24 {dimension_numbers = #tpu.dot_dimension_numbers<[2], [1], [1], [2], [0, 0, 0, 1, 1, 2], [0], [0]>} : vector<8x8x8xbf16>, vector<8x8x16xbf16>, vector<8x8x16xf32> -> vector<8x8x16xf32>
    "tpu.trace_stop"() : () -> ()
    %103 = vector.shape_cast %102 : vector<8x8x16xf32> to vector<64x16xf32>
    %104 = tpu.concatenate %28, %53, %78, %103 in 1 : vector<64x16xf32>, vector<64x16xf32>, vector<64x16xf32>, vector<64x16xf32> -> vector<64x64xf32>
    %105 = arith.truncf %104 : vector<64x64xf32> to vector<64x64xbf16>
    %cst_25 = arith.constant dense<0.000000e+00> : vector<64x32xf32>
    %106 = tpu.matmul %105, %2, %cst_25 {dimension_numbers = #tpu.dot_dimension_numbers<[1], [0], [0], [1], [0, 0, 1, 1], [], []>} : vector<64x64xbf16>, vector<64x32xbf16>, vector<64x32xf32> -> vector<64x32xf32>
    %c0_26 = arith.constant 0 : index
    %c0_27 = arith.constant 0 : index
    %107 = vector.load %arg4[%c0_26, %c0_27] : memref<64x32xf32, #tpu.memory_space<vmem>>, vector<64x32xf32>
    tpu.vector_store %arg4[%c0_26, %c0_27], %106 {strides = array<i32>} : memref<64x32xf32, #tpu.memory_space<vmem>>, vector<64x32xf32>,
    return
  }
  func.func @transform_0(%arg0: i32) -> (i32, i32) {
    %c0_i32 = arith.constant 0 : i32
    %c0_i32_0 = arith.constant 0 : i32
    return %arg0, %c0_i32 : i32, i32
  }
  func.func @transform_1(%arg0: i32) -> (i32, i32) {
    %c0_i32 = arith.constant 0 : i32
    %c0_i32_0 = arith.constant 0 : i32
    %c0_i32_1 = arith.constant 0 : i32
    return %c0_i32, %c0_i32_0 : i32, i32
  }
  func.func @transform_2(%arg0: i32) -> (i32, i32) {
    %c0_i32 = arith.constant 0 : i32
    %c0_i32_0 = arith.constant 0 : i32
    %c0_i32_1 = arith.constant 0 : i32
    return %c0_i32, %c0_i32_0 : i32, i32
  }
  func.func @transform_3(%arg0: i32) -> (i32, i32) {
    %c0_i32 = arith.constant 0 : i32
    %c0_i32_0 = arith.constant 0 : i32
    return %arg0, %c0_i32 : i32, i32
  }
}

</mosaic_0001>

<llo_original>
// kernel: tpu_custom_call.1
$region0: #{tpu_custom_call.1}
  #allocation0 [shape = 'u32[]', space=smem, size = 0x4, offset = 0x4, fixed_abs, tag = 'smem constant byte address 0x4 - core index']
  #allocation1 [shape = 'u32[72,128]{1,0:T(1,128)}', space=vmem, size = 0x9000, scoped, tag = 'internal scratch']
  %s0 = inlined_call_operand.vmem [shape: bf16[64,32], index: 0, kind: input, shape index: {}]
  %s1 = inlined_call_operand.vmem [shape: bf16[32,192], index: 1, kind: input, shape index: {}]
  %s2 = inlined_call_operand.vmem [shape: bf16[64,32], index: 2, kind: input, shape index: {}]
  %s3 = inlined_call_operand.vmem [shape: f32[64,32], index: 3, kind: output, shape index: {}]
  %s4 = sld [smem:[#allocation0]]
  $region22: #{tpu_custom_call.1} parent=0
    _
  %s6 = ssub.s32 1, %s4
  %s7 = scalar_select 0, %s6, %s4
  // Predicated region
  $region2: #{tpu_custom_call.1} parent=0 // pred_check
    _
  $region3: #{tpu_custom_call.1} parent=0 // pred_check_branch
    %9 = sbr.rel (0) target = $region5
  $region4: #{tpu_custom_call.1} parent=0 // pred_region
    _
  $region5: #{tpu_custom_call.1} parent=0 // pred_fallthru
    _
  // Predicated region
  $region6: #{tpu_custom_call.1} parent=0 // pred_check
    _
  $region7: #{tpu_custom_call.1} parent=0 // pred_check_branch
    %11 = sbr.rel (0) target = $region9
  $region8: #{tpu_custom_call.1} parent=0 // pred_region
    _
  $region9: #{tpu_custom_call.1} parent=0 // pred_fallthru
    _
  // Predicated region
  $region10: #{tpu_custom_call.1} parent=0 // pred_check
    _
  $region11: #{tpu_custom_call.1} parent=0 // pred_check_branch
    %13 = sbr.rel (0) target = $region13
  $region12: #{tpu_custom_call.1} parent=0 // pred_region
    _
  $region13: #{tpu_custom_call.1} parent=0 // pred_fallthru
    _
  %v15 = vld [vmem:[%s0] sm:$0xf]
  %v16 = vld [vmem:[%s0 + $0x4] sm:$0xf]
  %v17 = vld [vmem:[%s0 + $0x8] sm:$0xf]
  %v18 = vld [vmem:[%s0 + $0xc] sm:$0xf]
  %v19 = vld [vmem:[%s0 + $0x10] sm:$0xf]
  %v20 = vld [vmem:[%s0 + $0x14] sm:$0xf]
  %v21 = vld [vmem:[%s0 + $0x18] sm:$0xf]
  %v22 = vld [vmem:[%s0 + $0x1c] sm:$0xf]
  %v23 = vld [vmem:[%s1] sm:$0xff]
  %v24 = vld [vmem:[%s1 + $0x8] sm:$0xff]
  %v25 = vld [vmem:[%s1 + $0x10] sm:$0xff]
  %v26 = vld [vmem:[%s1 + $0x18] sm:$0xff]
  %v27 = vld [vmem:[%s2] sm:$0xf]
  %v28 = vld [vmem:[%s2 + $0x4] sm:$0xf]
  %v29 = vld [vmem:[%s2 + $0x8] sm:$0xf]
  %v30 = vld [vmem:[%s2 + $0xc] sm:$0xf]
  %v31 = vld [vmem:[%s2 + $0x10] sm:$0xf]
  %v32 = vld [vmem:[%s2 + $0x14] sm:$0xf]
  %v33 = vld [vmem:[%s2 + $0x18] sm:$0xf]
  %v34 = vld [vmem:[%s2 + $0x1c] sm:$0xf]
  %v43 = vunpack.c.l.b16 %v15
  %v44 = vunpack.c.l.b16 %v16
  %v45 = vunpack.c.l.b16 %v17
  %v46 = vunpack.c.l.b16 %v18
  %v47 = vunpack.c.l.b16 %v19
  %v48 = vunpack.c.l.b16 %v20
  %v49 = vunpack.c.l.b16 %v21
  %v50 = vunpack.c.l.b16 %v22
  %v51 = vpack.c.b16 %v44, %v43
  %v52 = vpack.c.b16 %v46, %v45
  %v53 = vpack.c.b16 %v48, %v47
  %v54 = vpack.c.b16 %v50, %v49
  %v59 = vunpack.c.l.b16 %v23
  %v60 = vunpack.c.h.b16 %v23
  %v61 = vunpack.c.l.b16 %v24
  %v62 = vunpack.c.h.b16 %v24
  %v63 = vunpack.c.l.b16 %v25
  %v64 = vunpack.c.h.b16 %v25
  %v65 = vunpack.c.l.b16 %v26
  %v66 = vunpack.c.h.b16 %v26
  %v67 = vpack.c.b16 %v61, %v59
  %v68 = vpack.c.b16 %v62, %v60
  %v69 = vpack.c.b16 %v65, %v63
  %v70 = vpack.c.b16 %v66, %v64
  %vm75 = vcmask 261120
  %v77 = vsel %vm75, %v51, 0
  %v80 = vsel %vm75, %v52, 0
  %v83 = vsel %vm75, %v53, 0
  %v86 = vsel %vm75, %v54, 0
  %88 = vmatpush.bf16.msra.mxu0 0
  %89 = vmatpush.bf16.msra.mxu0 0
  %90 = vmatpush.bf16.msra.mxu0 0
  %91 = vmatpush.bf16.msra.mxu0 0
  %92 = vmatpush.bf16.msra.mxu0 0
  %93 = vmatpush.bf16.msra.mxu0 0
  %94 = vmatpush.bf16.msra.mxu0 %v69
  %95 = vmatpush.bf16.msra.mxu0 %v67
  %96 = vmatmul.bf16.gmra.mxu0 %v77
  %v97 = vpop.f32.mrf.mxu0
  %v98 = vadd.f32 0.0, %v97
  %v99 = vpop.f32.mrf.mxu0
  %v100 = vadd.f32 0.0, %v99
  %101 = vmatmul.bf16.gmra.mxu0 %v80
  %v102 = vpop.f32.mrf.mxu0
  %v103 = vadd.f32 0.0, %v102
  %v104 = vpop.f32.mrf.mxu0
  %v105 = vadd.f32 0.0, %v104
  %106 = vmatmul.bf16.gmra.mxu0 %v83
  %v107 = vpop.f32.mrf.mxu0
  %v108 = vadd.f32 0.0, %v107
  %v109 = vpop.f32.mrf.mxu0
  %v110 = vadd.f32 0.0, %v109
  %111 = vmatmul.bf16.gmra.mxu0 %v86
  %v112 = vpop.f32.mrf.mxu0
  %v113 = vadd.f32 0.0, %v112
  %v114 = vpop.f32.mrf.mxu0
  %v115 = vadd.f32 0.0, %v114
  %116 = vdwg.mxu0
  %117 = vmatpush.bf16.msra.mxu0 0
  %118 = vmatpush.bf16.msra.mxu0 0
  %119 = vmatpush.bf16.msra.mxu0 0
  %120 = vmatpush.bf16.msra.mxu0 0
  %121 = vmatpush.bf16.msra.mxu0 0
  %122 = vmatpush.bf16.msra.mxu0 0
  %123 = vmatpush.bf16.msra.mxu0 %v70
  %124 = vmatpush.bf16.msra.mxu0 %v68
  %125 = vmatmul.bf16.gmra.mxu0 %v77
  %v126 = vpop.f32.mrf.mxu0
  %v127 = vadd.f32 0.0, %v126
  %v128 = vpop.f32.mrf.mxu0
  %v129 = vadd.f32 0.0, %v128
  %130 = vmatmul.bf16.gmra.mxu0 %v80
  %v131 = vpop.f32.mrf.mxu0
  %v132 = vadd.f32 0.0, %v131
  %v133 = vpop.f32.mrf.mxu0
  %v134 = vadd.f32 0.0, %v133
  %135 = vmatmul.bf16.gmra.mxu0 %v83
  %v136 = vpop.f32.mrf.mxu0
  %v137 = vadd.f32 0.0, %v136
  %v138 = vpop.f32.mrf.mxu0
  %v139 = vadd.f32 0.0, %v138
  %140 = vmatmul.bf16.gmra.mxu0 %v86
  %v141 = vpop.f32.mrf.mxu0
  %v142 = vadd.f32 0.0, %v141
  %v143 = vpop.f32.mrf.mxu0
  %v144 = vadd.f32 0.0, %v143
  %145 = vdwg.mxu0
  %v146 = vpack.c.bf16 %v98, %v98
  %v147 = vpack.c.bf16 %v100, %v100
  %v148 = vpack.c.bf16 %v103, %v103
  %v149 = vpack.c.bf16 %v105, %v105
  %v150 = vpack.c.bf16 %v108, %v108
  %v151 = vpack.c.bf16 %v110, %v110
  %v152 = vpack.c.bf16 %v113, %v113
  %v153 = vpack.c.bf16 %v115, %v115
  %v154 = vpack.c.bf16 %v127, %v127
  %v155 = vpack.c.bf16 %v129, %v129
  %v156 = vpack.c.bf16 %v132, %v132
  %v157 = vpack.c.bf16 %v134, %v134
  %v158 = vpack.c.bf16 %v137, %v137
  %v159 = vpack.c.bf16 %v139, %v139
  %v160 = vpack.c.bf16 %v142, %v142
  %v161 = vpack.c.bf16 %v144, %v144
  %v163 = vunpack.c.l.b16 %v146
  %v164 = vpack.c.b16 %v163, %v163
  %165 = vrot.lane.b32.xlu0 %v164, 64
  %v166 = vpop.permute.xlu0 %165
  %vm167 = vcmask 130048
  %v169 = vsel %vm167, %v146, 0
  %v172 = vsel %vm167, %v166, 0
  %174 = vmatpush.bf16.xpose.msra.mxu0 0
  %175 = vmatpush.bf16.xpose.msra.mxu0 0
  %176 = vmatpush.bf16.xpose.msra.mxu0 0
  %177 = vmatpush.bf16.xpose.msra.mxu0 0
  %178 = vmatpush.bf16.xpose.msra.mxu0 0
  %179 = vmatpush.bf16.xpose.msra.mxu0 0
  %180 = vmatpush.bf16.xpose.msra.mxu0 0
  %181 = vmatpush.bf16.xpose.msra.mxu0 %v172
  %182 = vmatmul.bf16.gmra.mxu0 %v169
  %v183 = vpop.f32.mrf.mxu0
  %v184 = vadd.f32 0.0, %v183
  %v185 = vpop.f32.mrf.mxu0
  %186 = vdwg.mxu0
  %v188 = vunpack.c.l.b16 %v147
  %v189 = vpack.c.b16 %v188, %v188
  %190 = vrot.lane.b32.xlu0 %v189, 64
  %v191 = vpop.permute.xlu0 %190
  %v193 = vsel %vm167, %v147, 0
  %v196 = vsel %vm167, %v191, 0
  %198 = vmatpush.bf16.xpose.msra.mxu0 0
  %199 = vmatpush.bf16.xpose.msra.mxu0 0
  %200 = vmatpush.bf16.xpose.msra.mxu0 0
  %201 = vmatpush.bf16.xpose.msra.mxu0 0
  %202 = vmatpush.bf16.xpose.msra.mxu0 0
  %203 = vmatpush.bf16.xpose.msra.mxu0 0
  %204 = vmatpush.bf16.xpose.msra.mxu0 0
  %205 = vmatpush.bf16.xpose.msra.mxu0 %v196
  %206 = vmatmul.bf16.gmra.mxu0 %v193
  %v207 = vpop.f32.mrf.mxu0
  %v208 = vadd.f32 0.0, %v207
  %v209 = vpop.f32.mrf.mxu0
  %210 = vdwg.mxu0
  %v212 = vunpack.c.l.b16 %v148
  %v213 = vpack.c.b16 %v212, %v212
  %214 = vrot.lane.b32.xlu0 %v213, 64
  %v215 = vpop.permute.xlu0 %214
  %v217 = vsel %vm167, %v148, 0
  %v220 = vsel %vm167, %v215, 0
  %222 = vmatpush.bf16.xpose.msra.mxu0 0
  %223 = vmatpush.bf16.xpose.msra.mxu0 0
  %224 = vmatpush.bf16.xpose.msra.mxu0 0
  %225 = vmatpush.bf16.xpose.msra.mxu0 0
  %226 = vmatpush.bf16.xpose.msra.mxu0 0
  %227 = vmatpush.bf16.xpose.msra.mxu0 0
  %228 = vmatpush.bf16.xpose.msra.mxu0 0
  %229 = vmatpush.bf16.xpose.msra.mxu0 %v220
  %230 = vmatmul.bf16.gmra.mxu0 %v217
  %v231 = vpop.f32.mrf.mxu0
  %v232 = vadd.f32 0.0, %v231
  %v233 = vpop.f32.mrf.mxu0
  %234 = vdwg.mxu0
  %v236 = vunpack.c.l.b16 %v149
  %v237 = vpack.c.b16 %v236, %v236
  %238 = vrot.lane.b32.xlu0 %v237, 64
  %v239 = vpop.permute.xlu0 %238
  %v241 = vsel %vm167, %v149, 0
  %v244 = vsel %vm167, %v239, 0
  %246 = vmatpush.bf16.xpose.msra.mxu0 0
  %247 = vmatpush.bf16.xpose.msra.mxu0 0
  %248 = vmatpush.bf16.xpose.msra.mxu0 0
  %249 = vmatpush.bf16.xpose.msra.mxu0 0
  %250 = vmatpush.bf16.xpose.msra.mxu0 0
  %251 = vmatpush.bf16.xpose.msra.mxu0 0
  %252 = vmatpush.bf16.xpose.msra.mxu0 0
  %253 = vmatpush.bf16.xpose.msra.mxu0 %v244
  %254 = vmatmul.bf16.gmra.mxu0 %v241
  %v255 = vpop.f32.mrf.mxu0
  %v256 = vadd.f32 0.0, %v255
  %v257 = vpop.f32.mrf.mxu0
  %258 = vdwg.mxu0
  %v260 = vunpack.c.l.b16 %v150
  %v261 = vpack.c.b16 %v260, %v260
  %262 = vrot.lane.b32.xlu0 %v261, 64
  %v263 = vpop.permute.xlu0 %262
  %v265 = vsel %vm167, %v150, 0
  %v268 = vsel %vm167, %v263, 0
  %270 = vmatpush.bf16.xpose.msra.mxu0 0
  %271 = vmatpush.bf16.xpose.msra.mxu0 0
  %272 = vmatpush.bf16.xpose.msra.mxu0 0
  %273 = vmatpush.bf16.xpose.msra.mxu0 0
  %274 = vmatpush.bf16.xpose.msra.mxu0 0
  %275 = vmatpush.bf16.xpose.msra.mxu0 0
  %276 = vmatpush.bf16.xpose.msra.mxu0 0
  %277 = vmatpush.bf16.xpose.msra.mxu0 %v268
  %278 = vmatmul.bf16.gmra.mxu0 %v265
  %v279 = vpop.f32.mrf.mxu0
  %v280 = vadd.f32 0.0, %v279
  %v281 = vpop.f32.mrf.mxu0
  %282 = vdwg.mxu0
  %v284 = vunpack.c.l.b16 %v151
  %v285 = vpack.c.b16 %v284, %v284
  %286 = vrot.lane.b32.xlu0 %v285, 64
  %v287 = vpop.permute.xlu0 %286
  %v289 = vsel %vm167, %v151, 0
  %v292 = vsel %vm167, %v287, 0
  %294 = vmatpush.bf16.xpose.msra.mxu0 0
  %295 = vmatpush.bf16.xpose.msra.mxu0 0
  %296 = vmatpush.bf16.xpose.msra.mxu0 0
  %297 = vmatpush.bf16.xpose.msra.mxu0 0
  %298 = vmatpush.bf16.xpose.msra.mxu0 0
  %299 = vmatpush.bf16.xpose.msra.mxu0 0
  %300 = vmatpush.bf16.xpose.msra.mxu0 0
  %301 = vmatpush.bf16.xpose.msra.mxu0 %v292
  %302 = vmatmul.bf16.gmra.mxu0 %v289
  %v303 = vpop.f32.mrf.mxu0
  %v304 = vadd.f32 0.0, %v303
  %v305 = vpop.f32.mrf.mxu0
  %306 = vdwg.mxu0
  %v308 = vunpack.c.l.b16 %v152
  %v309 = vpack.c.b16 %v308, %v308
  %310 = vrot.lane.b32.xlu0 %v309, 64
  %v311 = vpop.permute.xlu0 %310
  %v313 = vsel %vm167, %v152, 0
  %v316 = vsel %vm167, %v311, 0
  %318 = vmatpush.bf16.xpose.msra.mxu0 0
  %319 = vmatpush.bf16.xpose.msra.mxu0 0
  %320 = vmatpush.bf16.xpose.msra.mxu0 0
  %321 = vmatpush.bf16.xpose.msra.mxu0 0
  %322 = vmatpush.bf16.xpose.msra.mxu0 0
  %323 = vmatpush.bf16.xpose.msra.mxu0 0
  %324 = vmatpush.bf16.xpose.msra.mxu0 0
  %325 = vmatpush.bf16.xpose.msra.mxu0 %v316
  %326 = vmatmul.bf16.gmra.mxu0 %v313
  %v327 = vpop.f32.mrf.mxu0
  %v328 = vadd.f32 0.0, %v327
  %v329 = vpop.f32.mrf.mxu0
  %330 = vdwg.mxu0
  %v332 = vunpack.c.l.b16 %v153
  %v333 = vpack.c.b16 %v332, %v332
  %334 = vrot.lane.b32.xlu0 %v333, 64
  %v335 = vpop.permute.xlu0 %334
  %v337 = vsel %vm167, %v153, 0
  %v340 = vsel %vm167, %v335, 0
  %342 = vmatpush.bf16.xpose.msra.mxu0 0
  %343 = vmatpush.bf16.xpose.msra.mxu0 0
  %344 = vmatpush.bf16.xpose.msra.mxu0 0
  %345 = vmatpush.bf16.xpose.msra.mxu0 0
  %346 = vmatpush.bf16.xpose.msra.mxu0 0
  %347 = vmatpush.bf16.xpose.msra.mxu0 0
  %348 = vmatpush.bf16.xpose.msra.mxu0 0
  %349 = vmatpush.bf16.xpose.msra.mxu0 %v340
  %350 = vmatmul.bf16.gmra.mxu0 %v337
  %v351 = vpop.f32.mrf.mxu0
  %v352 = vadd.f32 0.0, %v351
  %v353 = vpop.f32.mrf.mxu0
  %354 = vdwg.mxu0
  %v355 = vmul.f32 %v184, 0.25
  %v356 = vmul.f32 %v208, 0.25
  %v357 = vmul.f32 %v232, 0.25
  %v358 = vmul.f32 %v256, 0.25
  %v359 = vmul.f32 %v280, 0.25
  %v360 = vmul.f32 %v304, 0.25
  %v361 = vmul.f32 %v328, 0.25
  %v362 = vmul.f32 %v352, 0.25
  %vm363 = vcmask 64512
  %v364 = vsel %vm363, %v355, -inf
  %365 = vmax.xlane.f32.xlu0 %v364
  %v366 = vpop.xlane.xlu0 %365
  %v367 = vsel %vm363, %v356, -inf
  %368 = vmax.xlane.f32.xlu0 %v367
  %v369 = vpop.xlane.xlu0 %368
  %v370 = vsel %vm363, %v357, -inf
  %371 = vmax.xlane.f32.xlu0 %v370
  %v372 = vpop.xlane.xlu0 %371
  %v373 = vsel %vm363, %v358, -inf
  %374 = vmax.xlane.f32.xlu0 %v373
  %v375 = vpop.xlane.xlu0 %374
  %v376 = vsel %vm363, %v359, -inf
  %377 = vmax.xlane.f32.xlu0 %v376
  %v378 = vpop.xlane.xlu0 %377
  %v379 = vsel %vm363, %v360, -inf
  %380 = vmax.xlane.f32.xlu0 %v379
  %v381 = vpop.xlane.xlu0 %380
  %v382 = vsel %vm363, %v361, -inf
  %383 = vmax.xlane.f32.xlu0 %v382
  %v384 = vpop.xlane.xlu0 %383
  %v385 = vsel %vm363, %v362, -inf
  %386 = vmax.xlane.f32.xlu0 %v385
  %v387 = vpop.xlane.xlu0 %386
  %v388 = vsub.f32 %v355, %v366
  %v389 = vsub.f32 %v356, %v369
  %v390 = vsub.f32 %v357, %v372
  %v391 = vsub.f32 %v358, %v375
  %v392 = vsub.f32 %v359, %v378
  %v393 = vsub.f32 %v360, %v381
  %v394 = vsub.f32 %v361, %v384
  %v395 = vsub.f32 %v362, %v387
  %v396 = vmul.f32 %v388, 1.442695
  %v397 = vpow.pop %v396
  %v398 = vmul.f32 %v389, 1.442695
  %v399 = vpow.pop %v398
  %v400 = vmul.f32 %v390, 1.442695
  %v401 = vpow.pop %v400
  %v402 = vmul.f32 %v391, 1.442695
  %v403 = vpow.pop %v402
  %v404 = vmul.f32 %v392, 1.442695
  %v405 = vpow.pop %v404
  %v406 = vmul.f32 %v393, 1.442695
  %v407 = vpow.pop %v406
  %v408 = vmul.f32 %v394, 1.442695
  %v409 = vpow.pop %v408
  %v410 = vmul.f32 %v395, 1.442695
  %v411 = vpow.pop %v410
  %v412 = vsel %vm363, %v397, 0.0
  %413 = vadd.xlane.f32.xlu0 %v412
  %v414 = vpop.xlane.xlu0 %413
  %v415 = vsel %vm363, %v399, 0.0
  %416 = vadd.xlane.f32.xlu0 %v415
  %v417 = vpop.xlane.xlu0 %416
  %v418 = vsel %vm363, %v401, 0.0
  %419 = vadd.xlane.f32.xlu0 %v418
  %v420 = vpop.xlane.xlu0 %419
  %v421 = vsel %vm363, %v403, 0.0
  %422 = vadd.xlane.f32.xlu0 %v421
  %v423 = vpop.xlane.xlu0 %422
  %v424 = vsel %vm363, %v405, 0.0
  %425 = vadd.xlane.f32.xlu0 %v424
  %v426 = vpop.xlane.xlu0 %425
  %v427 = vsel %vm363, %v407, 0.0
  %428 = vadd.xlane.f32.xlu0 %v427
  %v429 = vpop.xlane.xlu0 %428
  %v430 = vsel %vm363, %v409, 0.0
  %431 = vadd.xlane.f32.xlu0 %v430
  %v432 = vpop.xlane.xlu0 %431
  %v433 = vsel %vm363, %v411, 0.0
  %434 = vadd.xlane.f32.xlu0 %v433
  %v435 = vpop.xlane.xlu0 %434
  %v436 = vrcp.pop %v414
  %v437 = vrcp.pop %v417
  %v438 = vrcp.pop %v420
  %v439 = vrcp.pop %v423
  %v440 = vrcp.pop %v426
  %v441 = vrcp.pop %v429
  %v442 = vrcp.pop %v432
  %v443 = vrcp.pop %v435
  %v444 = vmul.f32 %v397, %v436
  %v445 = vmul.f32 %v399, %v437
  %v446 = vmul.f32 %v401, %v438
  %v447 = vmul.f32 %v403, %v439
  %v448 = vmul.f32 %v405, %v440
  %v449 = vmul.f32 %v407, %v441
  %v450 = vmul.f32 %v409, %v442
  %v451 = vmul.f32 %v411, %v443
  %v452 = vpack.c.bf16 %v444, %v444
  %v453 = vpack.c.bf16 %v445, %v445
  %v454 = vpack.c.bf16 %v446, %v446
  %v455 = vpack.c.bf16 %v447, %v447
  %v456 = vpack.c.bf16 %v448, %v448
  %v457 = vpack.c.bf16 %v449, %v449
  %v458 = vpack.c.bf16 %v450, %v450
  %v459 = vpack.c.bf16 %v451, %v451
  %v461 = vsel %vm363, %v452, 0
  %vm463 = vcmask 1043456
  %v465 = vsel %vm463, %v154, 0
  %467 = vmatpush.bf16.msra.mxu0 0
  %468 = vmatpush.bf16.msra.mxu0 0
  %469 = vmatpush.bf16.msra.mxu0 0
  %470 = vmatpush.bf16.msra.mxu0 0
  %471 = vmatpush.bf16.msra.mxu0 0
  %472 = vmatpush.bf16.msra.mxu0 0
  %473 = vmatpush.bf16.msra.mxu0 0
  %474 = vmatpush.bf16.msra.mxu0 %v465
  %475 = vmatmul.bf16.gmra.mxu0 %v461
  %v476 = vpop.f32.mrf.mxu0
  %v477 = vadd.f32 0.0, %v476
  %v478 = vpop.f32.mrf.mxu0
  %479 = vdwg.mxu0
  %v481 = vsel %vm363, %v453, 0
  %v484 = vsel %vm463, %v155, 0
  %486 = vmatpush.bf16.msra.mxu0 0
  %487 = vmatpush.bf16.msra.mxu0 0
  %488 = vmatpush.bf16.msra.mxu0 0
  %489 = vmatpush.bf16.msra.mxu0 0
  %490 = vmatpush.bf16.msra.mxu0 0
  %491 = vmatpush.bf16.msra.mxu0 0
  %492 = vmatpush.bf16.msra.mxu0 0
  %493 = vmatpush.bf16.msra.mxu0 %v484
  %494 = vmatmul.bf16.gmra.mxu0 %v481
  %v495 = vpop.f32.mrf.mxu0
  %v496 = vadd.f32 0.0, %v495
  %v497 = vpop.f32.mrf.mxu0
  %498 = vdwg.mxu0
  %v500 = vsel %vm363, %v454, 0
  %v503 = vsel %vm463, %v156, 0
  %505 = vmatpush.bf16.msra.mxu0 0
  %506 = vmatpush.bf16.msra.mxu0 0
  %507 = vmatpush.bf16.msra.mxu0 0
  %508 = vmatpush.bf16.msra.mxu0 0
  %509 = vmatpush.bf16.msra.mxu0 0
  %510 = vmatpush.bf16.msra.mxu0 0
  %511 = vmatpush.bf16.msra.mxu0 0
  %512 = vmatpush.bf16.msra.mxu0 %v503
  %513 = vmatmul.bf16.gmra.mxu0 %v500
  %v514 = vpop.f32.mrf.mxu0
  %v515 = vadd.f32 0.0, %v514
  %v516 = vpop.f32.mrf.mxu0
  %517 = vdwg.mxu0
  %v519 = vsel %vm363, %v455, 0
  %v522 = vsel %vm463, %v157, 0
  %524 = vmatpush.bf16.msra.mxu0 0
  %525 = vmatpush.bf16.msra.mxu0 0
  %526 = vmatpush.bf16.msra.mxu0 0
  %527 = vmatpush.bf16.msra.mxu0 0
  %528 = vmatpush.bf16.msra.mxu0 0
  %529 = vmatpush.bf16.msra.mxu0 0
  %530 = vmatpush.bf16.msra.mxu0 0
  %531 = vmatpush.bf16.msra.mxu0 %v522
  %532 = vmatmul.bf16.gmra.mxu0 %v519
  %v533 = vpop.f32.mrf.mxu0
  %v534 = vadd.f32 0.0, %v533
  %v535 = vpop.f32.mrf.mxu0
  %536 = vdwg.mxu0
  %v538 = vsel %vm363, %v456, 0
  %v541 = vsel %vm463, %v158, 0
  %543 = vmatpush.bf16.msra.mxu0 0
  %544 = vmatpush.bf16.msra.mxu0 0
  %545 = vmatpush.bf16.msra.mxu0 0
  %546 = vmatpush.bf16.msra.mxu0 0
  %547 = vmatpush.bf16.msra.mxu0 0
  %548 = vmatpush.bf16.msra.mxu0 0
  %549 = vmatpush.bf16.msra.mxu0 0
  %550 = vmatpush.bf16.msra.mxu0 %v541
  %551 = vmatmul.bf16.gmra.mxu0 %v538
  %v552 = vpop.f32.mrf.mxu0
  %v553 = vadd.f32 0.0, %v552
  %v554 = vpop.f32.mrf.mxu0
  %555 = vdwg.mxu0
  %v557 = vsel %vm363, %v457, 0
  %v560 = vsel %vm463, %v159, 0
  %562 = vmatpush.bf16.msra.mxu0 0
  %563 = vmatpush.bf16.msra.mxu0 0
  %564 = vmatpush.bf16.msra.mxu0 0
  %565 = vmatpush.bf16.msra.mxu0 0
  %566 = vmatpush.bf16.msra.mxu0 0
  %567 = vmatpush.bf16.msra.mxu0 0
  %568 = vmatpush.bf16.msra.mxu0 0
  %569 = vmatpush.bf16.msra.mxu0 %v560
  %570 = vmatmul.bf16.gmra.mxu0 %v557
  %v571 = vpop.f32.mrf.mxu0
  %v572 = vadd.f32 0.0, %v571
  %v573 = vpop.f32.mrf.mxu0
  %574 = vdwg.mxu0
  %v576 = vsel %vm363, %v458, 0
  %v579 = vsel %vm463, %v160, 0
  %581 = vmatpush.bf16.msra.mxu0 0
  %582 = vmatpush.bf16.msra.mxu0 0
  %583 = vmatpush.bf16.msra.mxu0 0
  %584 = vmatpush.bf16.msra.mxu0 0
  %585 = vmatpush.bf16.msra.mxu0 0
  %586 = vmatpush.bf16.msra.mxu0 0
  %587 = vmatpush.bf16.msra.mxu0 0
  %588 = vmatpush.bf16.msra.mxu0 %v579
  %589 = vmatmul.bf16.gmra.mxu0 %v576
  %v590 = vpop.f32.mrf.mxu0
  %v591 = vadd.f32 0.0, %v590
  %v592 = vpop.f32.mrf.mxu0
  %593 = vdwg.mxu0
  %v595 = vsel %vm363, %v459, 0
  %v598 = vsel %vm463, %v161, 0
  %600 = vmatpush.bf16.msra.mxu0 0
  %601 = vmatpush.bf16.msra.mxu0 0
  %602 = vmatpush.bf16.msra.mxu0 0
  %603 = vmatpush.bf16.msra.mxu0 0
  %604 = vmatpush.bf16.msra.mxu0 0
  %605 = vmatpush.bf16.msra.mxu0 0
  %606 = vmatpush.bf16.msra.mxu0 0
  %607 = vmatpush.bf16.msra.mxu0 %v598
  %608 = vmatmul.bf16.gmra.mxu0 %v595
  %v609 = vpop.f32.mrf.mxu0
  %v610 = vadd.f32 0.0, %v609
  %v611 = vpop.f32.mrf.mxu0
  %612 = vdwg.mxu0
  %613 = vrot.lane.b32.xlu0 %v164, 112
  %v614 = vpop.permute.xlu0 %613
  %615 = vrot.lane.b32.xlu0 %v164, 48
  %v616 = vpop.permute.xlu0 %615
  %v618 = vsel %vm167, %v614, 0
  %v621 = vsel %vm167, %v616, 0
  %623 = vmatpush.bf16.xpose.msra.mxu0 0
  %624 = vmatpush.bf16.xpose.msra.mxu0 0
  %625 = vmatpush.bf16.xpose.msra.mxu0 0
  %626 = vmatpush.bf16.xpose.msra.mxu0 0
  %627 = vmatpush.bf16.xpose.msra.mxu0 0
  %628 = vmatpush.bf16.xpose.msra.mxu0 0
  %629 = vmatpush.bf16.xpose.msra.mxu0 0
  %630 = vmatpush.bf16.xpose.msra.mxu0 %v621
  %631 = vmatmul.bf16.gmra.mxu0 %v618
  %v632 = vpop.f32.mrf.mxu0
  %v633 = vadd.f32 0.0, %v632
  %v634 = vpop.f32.mrf.mxu0
  %635 = vdwg.mxu0
  %636 = vrot.lane.b32.xlu0 %v189, 112
  %v637 = vpop.permute.xlu0 %636
  %638 = vrot.lane.b32.xlu0 %v189, 48
  %v639 = vpop.permute.xlu0 %638
  %v641 = vsel %vm167, %v637, 0
  %v644 = vsel %vm167, %v639, 0
  %646 = vmatpush.bf16.xpose.msra.mxu0 0
  %647 = vmatpush.bf16.xpose.msra.mxu0 0
  %648 = vmatpush.bf16.xpose.msra.mxu0 0
  %649 = vmatpush.bf16.xpose.msra.mxu0 0
  %650 = vmatpush.bf16.xpose.msra.mxu0 0
  %651 = vmatpush.bf16.xpose.msra.mxu0 0
  %652 = vmatpush.bf16.xpose.msra.mxu0 0
  %653 = vmatpush.bf16.xpose.msra.mxu0 %v644
  %654 = vmatmul.bf16.gmra.mxu0 %v641
  %v655 = vpop.f32.mrf.mxu0
  %v656 = vadd.f32 0.0, %v655
  %v657 = vpop.f32.mrf.mxu0
  %658 = vdwg.mxu0
  %659 = vrot.lane.b32.xlu0 %v213, 112
  %v660 = vpop.permute.xlu0 %659
  %661 = vrot.lane.b32.xlu0 %v213, 48
  %v662 = vpop.permute.xlu0 %661
  %v664 = vsel %vm167, %v660, 0
  %v667 = vsel %vm167, %v662, 0
  %669 = vmatpush.bf16.xpose.msra.mxu0 0
  %670 = vmatpush.bf16.xpose.msra.mxu0 0
  %671 = vmatpush.bf16.xpose.msra.mxu0 0
  %672 = vmatpush.bf16.xpose.msra.mxu0 0
  %673 = vmatpush.bf16.xpose.msra.mxu0 0
  %674 = vmatpush.bf16.xpose.msra.mxu0 0
  %675 = vmatpush.bf16.xpose.msra.mxu0 0
  %676 = vmatpush.bf16.xpose.msra.mxu0 %v667
  %677 = vmatmul.bf16.gmra.mxu0 %v664
  %v678 = vpop.f32.mrf.mxu0
  %v679 = vadd.f32 0.0, %v678
  %v680 = vpop.f32.mrf.mxu0
  %681 = vdwg.mxu0
  %682 = vrot.lane.b32.xlu0 %v237, 112
  %v683 = vpop.permute.xlu0 %682
  %684 = vrot.lane.b32.xlu0 %v237, 48
  %v685 = vpop.permute.xlu0 %684
  %v687 = vsel %vm167, %v683, 0
  %v690 = vsel %vm167, %v685, 0
  %692 = vmatpush.bf16.xpose.msra.mxu0 0
  %693 = vmatpush.bf16.xpose.msra.mxu0 0
  %694 = vmatpush.bf16.xpose.msra.mxu0 0
  %695 = vmatpush.bf16.xpose.msra.mxu0 0
  %696 = vmatpush.bf16.xpose.msra.mxu0 0
  %697 = vmatpush.bf16.xpose.msra.mxu0 0
  %698 = vmatpush.bf16.xpose.msra.mxu0 0
  %699 = vmatpush.bf16.xpose.msra.mxu0 %v690
  %700 = vmatmul.bf16.gmra.mxu0 %v687
  %v701 = vpop.f32.mrf.mxu0
  %v702 = vadd.f32 0.0, %v701
  %v703 = vpop.f32.mrf.mxu0
  %704 = vdwg.mxu0
  %705 = vrot.lane.b32.xlu0 %v261, 112
  %v706 = vpop.permute.xlu0 %705
  %707 = vrot.lane.b32.xlu0 %v261, 48
  %v708 = vpop.permute.xlu0 %707
  %v710 = vsel %vm167, %v706, 0
  %v713 = vsel %vm167, %v708, 0
  %715 = vmatpush.bf16.xpose.msra.mxu0 0
  %716 = vmatpush.bf16.xpose.msra.mxu0 0
  %717 = vmatpush.bf16.xpose.msra.mxu0 0
  %718 = vmatpush.bf16.xpose.msra.mxu0 0
  %719 = vmatpush.bf16.xpose.msra.mxu0 0
  %720 = vmatpush.bf16.xpose.msra.mxu0 0
  %721 = vmatpush.bf16.xpose.msra.mxu0 0
  %722 = vmatpush.bf16.xpose.msra.mxu0 %v713
  %723 = vmatmul.bf16.gmra.mxu0 %v710
  %v724 = vpop.f32.mrf.mxu0
  %v725 = vadd.f32 0.0, %v724
  %v726 = vpop.f32.mrf.mxu0
  %727 = vdwg.mxu0
  %728 = vrot.lane.b32.xlu0 %v285, 112
  %v729 = vpop.permute.xlu0 %728
  %730 = vrot.lane.b32.xlu0 %v285, 48
  %v731 = vpop.permute.xlu0 %730
  %v733 = vsel %vm167, %v729, 0
  %v736 = vsel %vm167, %v731, 0
  %738 = vmatpush.bf16.xpose.msra.mxu0 0
  %739 = vmatpush.bf16.xpose.msra.mxu0 0
  %740 = vmatpush.bf16.xpose.msra.mxu0 0
  %741 = vmatpush.bf16.xpose.msra.mxu0 0
  %742 = vmatpush.bf16.xpose.msra.mxu0 0
  %743 = vmatpush.bf16.xpose.msra.mxu0 0
  %744 = vmatpush.bf16.xpose.msra.mxu0 0
  %745 = vmatpush.bf16.xpose.msra.mxu0 %v736
  %746 = vmatmul.bf16.gmra.mxu0 %v733
  %v747 = vpop.f32.mrf.mxu0
  %v748 = vadd.f32 0.0, %v747
  %v749 = vpop.f32.mrf.mxu0
  %750 = vdwg.mxu0
  %751 = vrot.lane.b32.xlu0 %v309, 112
  %v752 = vpop.permute.xlu0 %751
  %753 = vrot.lane.b32.xlu0 %v309, 48
  %v754 = vpop.permute.xlu0 %753
  %v756 = vsel %vm167, %v752, 0
  %v759 = vsel %vm167, %v754, 0
  %761 = vmatpush.bf16.xpose.msra.mxu0 0
  %762 = vmatpush.bf16.xpose.msra.mxu0 0
  %763 = vmatpush.bf16.xpose.msra.mxu0 0
  %764 = vmatpush.bf16.xpose.msra.mxu0 0
  %765 = vmatpush.bf16.xpose.msra.mxu0 0
  %766 = vmatpush.bf16.xpose.msra.mxu0 0
  %767 = vmatpush.bf16.xpose.msra.mxu0 0
  %768 = vmatpush.bf16.xpose.msra.mxu0 %v759
  %769 = vmatmul.bf16.gmra.mxu0 %v756
  %v770 = vpop.f32.mrf.mxu0
  %v771 = vadd.f32 0.0, %v770
  %v772 = vpop.f32.mrf.mxu0
  %773 = vdwg.mxu0
  %774 = vrot.lane.b32.xlu0 %v333, 112
  %v775 = vpop.permute.xlu0 %774
  %776 = vrot.lane.b32.xlu0 %v333, 48
  %v777 = vpop.permute.xlu0 %776
  %v779 = vsel %vm167, %v775, 0
  %v782 = vsel %vm167, %v777, 0
  %784 = vmatpush.bf16.xpose.msra.mxu0 0
  %785 = vmatpush.bf16.xpose.msra.mxu0 0
  %786 = vmatpush.bf16.xpose.msra.mxu0 0
  %787 = vmatpush.bf16.xpose.msra.mxu0 0
  %788 = vmatpush.bf16.xpose.msra.mxu0 0
  %789 = vmatpush.bf16.xpose.msra.mxu0 0
  %790 = vmatpush.bf16.xpose.msra.mxu0 0
  %791 = vmatpush.bf16.xpose.msra.mxu0 %v782
  %792 = vmatmul.bf16.gmra.mxu0 %v779
  %v793 = vpop.f32.mrf.mxu0
  %v794 = vadd.f32 0.0, %v793
  %v795 = vpop.f32.mrf.mxu0
  %796 = vdwg.mxu0
  %v797 = vmul.f32 %v633, 0.25
  %v798 = vmul.f32 %v656, 0.25
  %v799 = vmul.f32 %v679, 0.25
  %v800 = vmul.f32 %v702, 0.25
  %v801 = vmul.f32 %v725, 0.25
  %v802 = vmul.f32 %v748, 0.25
  %v803 = vmul.f32 %v771, 0.25
  %v804 = vmul.f32 %v794, 0.25
  %v805 = vsel %vm363, %v797, -inf
  %806 = vmax.xlane.f32.xlu0 %v805
  %v807 = vpop.xlane.xlu0 %806
  %v808 = vsel %vm363, %v798, -inf
  %809 = vmax.xlane.f32.xlu0 %v808
  %v810 = vpop.xlane.xlu0 %809
  %v811 = vsel %vm363, %v799, -inf
  %812 = vmax.xlane.f32.xlu0 %v811
  %v813 = vpop.xlane.xlu0 %812
  %v814 = vsel %vm363, %v800, -inf
  %815 = vmax.xlane.f32.xlu0 %v814
  %v816 = vpop.xlane.xlu0 %815
  %v817 = vsel %vm363, %v801, -inf
  %818 = vmax.xlane.f32.xlu0 %v817
  %v819 = vpop.xlane.xlu0 %818
  %v820 = vsel %vm363, %v802, -inf
  %821 = vmax.xlane.f32.xlu0 %v820
  %v822 = vpop.xlane.xlu0 %821
  %v823 = vsel %vm363, %v803, -inf
  %824 = vmax.xlane.f32.xlu0 %v823
  %v825 = vpop.xlane.xlu0 %824
  %v826 = vsel %vm363, %v804, -inf
  %827 = vmax.xlane.f32.xlu0 %v826
  %v828 = vpop.xlane.xlu0 %827
  %v829 = vsub.f32 %v797, %v807
  %v830 = vsub.f32 %v798, %v810
  %v831 = vsub.f32 %v799, %v813
  %v832 = vsub.f32 %v800, %v816
  %v833 = vsub.f32 %v801, %v819
  %v834 = vsub.f32 %v802, %v822
  %v835 = vsub.f32 %v803, %v825
  %v836 = vsub.f32 %v804, %v828
  %v837 = vmul.f32 %v829, 1.442695
  %v838 = vpow.pop %v837
  %v839 = vmul.f32 %v830, 1.442695
  %v840 = vpow.pop %v839
  %v841 = vmul.f32 %v831, 1.442695
  %v842 = vpow.pop %v841
  %v843 = vmul.f32 %v832, 1.442695
  %v844 = vpow.pop %v843
  %v845 = vmul.f32 %v833, 1.442695
  %v846 = vpow.pop %v845
  %v847 = vmul.f32 %v834, 1.442695
  %v848 = vpow.pop %v847
  %v849 = vmul.f32 %v835, 1.442695
  %v850 = vpow.pop %v849
  %v851 = vmul.f32 %v836, 1.442695
  %v852 = vpow.pop %v851
  %v853 = vsel %vm363, %v838, 0.0
  %854 = vadd.xlane.f32.xlu0 %v853
  %v855 = vpop.xlane.xlu0 %854
  %v856 = vsel %vm363, %v840, 0.0
  %857 = vadd.xlane.f32.xlu0 %v856
  %v858 = vpop.xlane.xlu0 %857
  %v859 = vsel %vm363, %v842, 0.0
  %860 = vadd.xlane.f32.xlu0 %v859
  %v861 = vpop.xlane.xlu0 %860
  %v862 = vsel %vm363, %v844, 0.0
  %863 = vadd.xlane.f32.xlu0 %v862
  %v864 = vpop.xlane.xlu0 %863
  %v865 = vsel %vm363, %v846, 0.0
  %866 = vadd.xlane.f32.xlu0 %v865
  %v867 = vpop.xlane.xlu0 %866
  %v868 = vsel %vm363, %v848, 0.0
  %869 = vadd.xlane.f32.xlu0 %v868
  %v870 = vpop.xlane.xlu0 %869
  %v871 = vsel %vm363, %v850, 0.0
  %872 = vadd.xlane.f32.xlu0 %v871
  %v873 = vpop.xlane.xlu0 %872
  %v874 = vsel %vm363, %v852, 0.0
  %875 = vadd.xlane.f32.xlu0 %v874
  %v876 = vpop.xlane.xlu0 %875
  %v877 = vrcp.pop %v855
  %v878 = vrcp.pop %v858
  %v879 = vrcp.pop %v861
  %v880 = vrcp.pop %v864
  %v881 = vrcp.pop %v867
  %v882 = vrcp.pop %v870
  %v883 = vrcp.pop %v873
  %v884 = vrcp.pop %v876
  %v885 = vmul.f32 %v838, %v877
  %v886 = vmul.f32 %v840, %v878
  %v887 = vmul.f32 %v842, %v879
  %v888 = vmul.f32 %v844, %v880
  %v889 = vmul.f32 %v846, %v881
  %v890 = vmul.f32 %v848, %v882
  %v891 = vmul.f32 %v850, %v883
  %v892 = vmul.f32 %v852, %v884
  %v893 = vpack.c.bf16 %v885, %v885
  %v894 = vpack.c.bf16 %v886, %v886
  %v895 = vpack.c.bf16 %v887, %v887
  %v896 = vpack.c.bf16 %v888, %v888
  %v897 = vpack.c.bf16 %v889, %v889
  %v898 = vpack.c.bf16 %v890, %v890
  %v899 = vpack.c.bf16 %v891, %v891
  %v900 = vpack.c.bf16 %v892, %v892
  %v902 = vunpack.c.l.b16 %v154
  %v903 = vpack.c.b16 %v902, %v902
  %904 = vrot.lane.b32.xlu0 %v903, 112
  %v905 = vpop.permute.xlu0 %904
  %v907 = vsel %vm363, %v893, 0
  %v910 = vsel %vm463, %v905, 0
  %912 = vmatpush.bf16.msra.mxu0 0
  %913 = vmatpush.bf16.msra.mxu0 0
  %914 = vmatpush.bf16.msra.mxu0 0
  %915 = vmatpush.bf16.msra.mxu0 0
  %916 = vmatpush.bf16.msra.mxu0 0
  %917 = vmatpush.bf16.msra.mxu0 0
  %918 = vmatpush.bf16.msra.mxu0 0
  %919 = vmatpush.bf16.msra.mxu0 %v910
  %920 = vmatmul.bf16.gmra.mxu0 %v907
  %v921 = vpop.f32.mrf.mxu0
  %v922 = vadd.f32 0.0, %v921
  %v923 = vpop.f32.mrf.mxu0
  %924 = vdwg.mxu0
  %v926 = vunpack.c.l.b16 %v155
  %v927 = vpack.c.b16 %v926, %v926
  %928 = vrot.lane.b32.xlu0 %v927, 112
  %v929 = vpop.permute.xlu0 %928
  %v931 = vsel %vm363, %v894, 0
  %v934 = vsel %vm463, %v929, 0
  %936 = vmatpush.bf16.msra.mxu0 0
  %937 = vmatpush.bf16.msra.mxu0 0
  %938 = vmatpush.bf16.msra.mxu0 0
  %939 = vmatpush.bf16.msra.mxu0 0
  %940 = vmatpush.bf16.msra.mxu0 0
  %941 = vmatpush.bf16.msra.mxu0 0
  %942 = vmatpush.bf16.msra.mxu0 0
  %943 = vmatpush.bf16.msra.mxu0 %v934
  %944 = vmatmul.bf16.gmra.mxu0 %v931
  %v945 = vpop.f32.mrf.mxu0
  %v946 = vadd.f32 0.0, %v945
  %v947 = vpop.f32.mrf.mxu0
  %948 = vdwg.mxu0
  %v950 = vunpack.c.l.b16 %v156
  %v951 = vpack.c.b16 %v950, %v950
  %952 = vrot.lane.b32.xlu0 %v951, 112
  %v953 = vpop.permute.xlu0 %952
  %v955 = vsel %vm363, %v895, 0
  %v958 = vsel %vm463, %v953, 0
  %960 = vmatpush.bf16.msra.mxu0 0
  %961 = vmatpush.bf16.msra.mxu0 0
  %962 = vmatpush.bf16.msra.mxu0 0
  %963 = vmatpush.bf16.msra.mxu0 0
  %964 = vmatpush.bf16.msra.mxu0 0
  %965 = vmatpush.bf16.msra.mxu0 0
  %966 = vmatpush.bf16.msra.mxu0 0
  %967 = vmatpush.bf16.msra.mxu0 %v958
  %968 = vmatmul.bf16.gmra.mxu0 %v955
  %v969 = vpop.f32.mrf.mxu0
  %v970 = vadd.f32 0.0, %v969
  %v971 = vpop.f32.mrf.mxu0
  %972 = vdwg.mxu0
  %v974 = vunpack.c.l.b16 %v157
  %v975 = vpack.c.b16 %v974, %v974
  %976 = vrot.lane.b32.xlu0 %v975, 112
  %v977 = vpop.permute.xlu0 %976
  %v979 = vsel %vm363, %v896, 0
  %v982 = vsel %vm463, %v977, 0
  %984 = vmatpush.bf16.msra.mxu0 0
  %985 = vmatpush.bf16.msra.mxu0 0
  %986 = vmatpush.bf16.msra.mxu0 0
  %987 = vmatpush.bf16.msra.mxu0 0
  %988 = vmatpush.bf16.msra.mxu0 0
  %989 = vmatpush.bf16.msra.mxu0 0
  %990 = vmatpush.bf16.msra.mxu0 0
  %991 = vmatpush.bf16.msra.mxu0 %v982
  %992 = vmatmul.bf16.gmra.mxu0 %v979
  %v993 = vpop.f32.mrf.mxu0
  %v994 = vadd.f32 0.0, %v993
  %v995 = vpop.f32.mrf.mxu0
  %996 = vdwg.mxu0
  %v998 = vunpack.c.l.b16 %v158
  %v999 = vpack.c.b16 %v998, %v998
  %1000 = vrot.lane.b32.xlu0 %v999, 112
  %v1001 = vpop.permute.xlu0 %1000
  %v1003 = vsel %vm363, %v897, 0
  %v1006 = vsel %vm463, %v1001, 0
  %1008 = vmatpush.bf16.msra.mxu0 0
  %1009 = vmatpush.bf16.msra.mxu0 0
  %1010 = vmatpush.bf16.msra.mxu0 0
  %1011 = vmatpush.bf16.msra.mxu0 0
  %1012 = vmatpush.bf16.msra.mxu0 0
  %1013 = vmatpush.bf16.msra.mxu0 0
  %1014 = vmatpush.bf16.msra.mxu0 0
  %1015 = vmatpush.bf16.msra.mxu0 %v1006
  %1016 = vmatmul.bf16.gmra.mxu0 %v1003
  %v1017 = vpop.f32.mrf.mxu0
  %v1018 = vadd.f32 0.0, %v1017
  %v1019 = vpop.f32.mrf.mxu0
  %1020 = vdwg.mxu0
  %v1022 = vunpack.c.l.b16 %v159
  %v1023 = vpack.c.b16 %v1022, %v1022
  %1024 = vrot.lane.b32.xlu0 %v1023, 112
  %v1025 = vpop.permute.xlu0 %1024
  %v1027 = vsel %vm363, %v898, 0
  %v1030 = vsel %vm463, %v1025, 0
  %1032 = vmatpush.bf16.msra.mxu0 0
  %1033 = vmatpush.bf16.msra.mxu0 0
  %1034 = vmatpush.bf16.msra.mxu0 0
  %1035 = vmatpush.bf16.msra.mxu0 0
  %1036 = vmatpush.bf16.msra.mxu0 0
  %1037 = vmatpush.bf16.msra.mxu0 0
  %1038 = vmatpush.bf16.msra.mxu0 0
  %1039 = vmatpush.bf16.msra.mxu0 %v1030
  %1040 = vmatmul.bf16.gmra.mxu0 %v1027
  %v1041 = vpop.f32.mrf.mxu0
  %v1042 = vadd.f32 0.0, %v1041
  %v1043 = vpop.f32.mrf.mxu0
  %1044 = vdwg.mxu0
  %v1046 = vunpack.c.l.b16 %v160
  %v1047 = vpack.c.b16 %v1046, %v1046
  %1048 = vrot.lane.b32.xlu0 %v1047, 112
  %v1049 = vpop.permute.xlu0 %1048
  %v1051 = vsel %vm363, %v899, 0
  %v1054 = vsel %vm463, %v1049, 0
  %1056 = vmatpush.bf16.msra.mxu0 0
  %1057 = vmatpush.bf16.msra.mxu0 0
  %1058 = vmatpush.bf16.msra.mxu0 0
  %1059 = vmatpush.bf16.msra.mxu0 0
  %1060 = vmatpush.bf16.msra.mxu0 0
  %1061 = vmatpush.bf16.msra.mxu0 0
  %1062 = vmatpush.bf16.msra.mxu0 0
  %1063 = vmatpush.bf16.msra.mxu0 %v1054
  %1064 = vmatmul.bf16.gmra.mxu0 %v1051
  %v1065 = vpop.f32.mrf.mxu0
  %v1066 = vadd.f32 0.0, %v1065
  %v1067 = vpop.f32.mrf.mxu0
  %1068 = vdwg.mxu0
  %v1070 = vunpack.c.l.b16 %v161
  %v1071 = vpack.c.b16 %v1070, %v1070
  %1072 = vrot.lane.b32.xlu0 %v1071, 112
  %v1073 = vpop.permute.xlu0 %1072
  %v1075 = vsel %vm363, %v900, 0
  %v1078 = vsel %vm463, %v1073, 0
  %1080 = vmatpush.bf16.msra.mxu0 0
  %1081 = vmatpush.bf16.msra.mxu0 0
  %1082 = vmatpush.bf16.msra.mxu0 0
  %1083 = vmatpush.bf16.msra.mxu0 0
  %1084 = vmatpush.bf16.msra.mxu0 0
  %1085 = vmatpush.bf16.msra.mxu0 0
  %1086 = vmatpush.bf16.msra.mxu0 0
  %1087 = vmatpush.bf16.msra.mxu0 %v1078
  %1088 = vmatmul.bf16.gmra.mxu0 %v1075
  %v1089 = vpop.f32.mrf.mxu0
  %v1090 = vadd.f32 0.0, %v1089
  %v1091 = vpop.f32.mrf.mxu0
  %1092 = vdwg.mxu0
  %1093 = vrot.lane.b32.xlu0 %v164, 96
  %v1094 = vpop.permute.xlu0 %1093
  %1095 = vrot.lane.b32.xlu0 %v164, 32
  %v1096 = vpop.permute.xlu0 %1095
  %v1098 = vsel %vm167, %v1094, 0
  %v1101 = vsel %vm167, %v1096, 0
  %1103 = vmatpush.bf16.xpose.msra.mxu0 0
  %1104 = vmatpush.bf16.xpose.msra.mxu0 0
  %1105 = vmatpush.bf16.xpose.msra.mxu0 0
  %1106 = vmatpush.bf16.xpose.msra.mxu0 0
  %1107 = vmatpush.bf16.xpose.msra.mxu0 0
  %1108 = vmatpush.bf16.xpose.msra.mxu0 0
  %1109 = vmatpush.bf16.xpose.msra.mxu0 0
  %1110 = vmatpush.bf16.xpose.msra.mxu0 %v1101
  %1111 = vmatmul.bf16.gmra.mxu0 %v1098
  %v1112 = vpop.f32.mrf.mxu0
  %v1113 = vadd.f32 0.0, %v1112
  %v1114 = vpop.f32.mrf.mxu0
  %1115 = vdwg.mxu0
  %1116 = vrot.lane.b32.xlu0 %v189, 96
  %v1117 = vpop.permute.xlu0 %1116
  %1118 = vrot.lane.b32.xlu0 %v189, 32
  %v1119 = vpop.permute.xlu0 %1118
  %v1121 = vsel %vm167, %v1117, 0
  %v1124 = vsel %vm167, %v1119, 0
  %1126 = vmatpush.bf16.xpose.msra.mxu0 0
  %1127 = vmatpush.bf16.xpose.msra.mxu0 0
  %1128 = vmatpush.bf16.xpose.msra.mxu0 0
  %1129 = vmatpush.bf16.xpose.msra.mxu0 0
  %1130 = vmatpush.bf16.xpose.msra.mxu0 0
  %1131 = vmatpush.bf16.xpose.msra.mxu0 0
  %1132 = vmatpush.bf16.xpose.msra.mxu0 0
  %1133 = vmatpush.bf16.xpose.msra.mxu0 %v1124
  %1134 = vmatmul.bf16.gmra.mxu0 %v1121
  %v1135 = vpop.f32.mrf.mxu0
  %v1136 = vadd.f32 0.0, %v1135
  %v1137 = vpop.f32.mrf.mxu0
  %1138 = vdwg.mxu0
  %1139 = vrot.lane.b32.xlu0 %v213, 96
  %v1140 = vpop.permute.xlu0 %1139
  %1141 = vrot.lane.b32.xlu0 %v213, 32
  %v1142 = vpop.permute.xlu0 %1141
  %v1144 = vsel %vm167, %v1140, 0
  %v1147 = vsel %vm167, %v1142, 0
  %1149 = vmatpush.bf16.xpose.msra.mxu0 0
  %1150 = vmatpush.bf16.xpose.msra.mxu0 0
  %1151 = vmatpush.bf16.xpose.msra.mxu0 0
  %1152 = vmatpush.bf16.xpose.msra.mxu0 0
  %1153 = vmatpush.bf16.xpose.msra.mxu0 0
  %1154 = vmatpush.bf16.xpose.msra.mxu0 0
  %1155 = vmatpush.bf16.xpose.msra.mxu0 0
  %1156 = vmatpush.bf16.xpose.msra.mxu0 %v1147
  %1157 = vmatmul.bf16.gmra.mxu0 %v1144
  %v1158 = vpop.f32.mrf.mxu0
  %v1159 = vadd.f32 0.0, %v1158
  %v1160 = vpop.f32.mrf.mxu0
  %1161 = vdwg.mxu0
  %1162 = vrot.lane.b32.xlu0 %v237, 96
  %v1163 = vpop.permute.xlu0 %1162
  %1164 = vrot.lane.b32.xlu0 %v237, 32
  %v1165 = vpop.permute.xlu0 %1164
  %v1167 = vsel %vm167, %v1163, 0
  %v1170 = vsel %vm167, %v1165, 0
  %1172 = vmatpush.bf16.xpose.msra.mxu0 0
  %1173 = vmatpush.bf16.xpose.msra.mxu0 0
  %1174 = vmatpush.bf16.xpose.msra.mxu0 0
  %1175 = vmatpush.bf16.xpose.msra.mxu0 0
  %1176 = vmatpush.bf16.xpose.msra.mxu0 0
  %1177 = vmatpush.bf16.xpose.msra.mxu0 0
  %1178 = vmatpush.bf16.xpose.msra.mxu0 0
  %1179 = vmatpush.bf16.xpose.msra.mxu0 %v1170
  %1180 = vmatmul.bf16.gmra.mxu0 %v1167
  %v1181 = vpop.f32.mrf.mxu0
  %v1182 = vadd.f32 0.0, %v1181
  %v1183 = vpop.f32.mrf.mxu0
  %1184 = vdwg.mxu0
  %1185 = vrot.lane.b32.xlu0 %v261, 96
  %v1186 = vpop.permute.xlu0 %1185
  %1187 = vrot.lane.b32.xlu0 %v261, 32
  %v1188 = vpop.permute.xlu0 %1187
  %v1190 = vsel %vm167, %v1186, 0
  %v1193 = vsel %vm167, %v1188, 0
  %1195 = vmatpush.bf16.xpose.msra.mxu0 0
  %1196 = vmatpush.bf16.xpose.msra.mxu0 0
  %1197 = vmatpush.bf16.xpose.msra.mxu0 0
  %1198 = vmatpush.bf16.xpose.msra.mxu0 0
  %1199 = vmatpush.bf16.xpose.msra.mxu0 0
  %1200 = vmatpush.bf16.xpose.msra.mxu0 0
  %1201 = vmatpush.bf16.xpose.msra.mxu0 0
  %1202 = vmatpush.bf16.xpose.msra.mxu0 %v1193
  %1203 = vmatmul.bf16.gmra.mxu0 %v1190
  %v1204 = vpop.f32.mrf.mxu0
  %v1205 = vadd.f32 0.0, %v1204
  %v1206 = vpop.f32.mrf.mxu0
  %1207 = vdwg.mxu0
  %1208 = vrot.lane.b32.xlu0 %v285, 96
  %v1209 = vpop.permute.xlu0 %1208
  %1210 = vrot.lane.b32.xlu0 %v285, 32
  %v1211 = vpop.permute.xlu0 %1210
  %v1213 = vsel %vm167, %v1209, 0
  %v1216 = vsel %vm167, %v1211, 0
  %1218 = vmatpush.bf16.xpose.msra.mxu0 0
  %1219 = vmatpush.bf16.xpose.msra.mxu0 0
  %1220 = vmatpush.bf16.xpose.msra.mxu0 0
  %1221 = vmatpush.bf16.xpose.msra.mxu0 0
  %1222 = vmatpush.bf16.xpose.msra.mxu0 0
  %1223 = vmatpush.bf16.xpose.msra.mxu0 0
  %1224 = vmatpush.bf16.xpose.msra.mxu0 0
  %1225 = vmatpush.bf16.xpose.msra.mxu0 %v1216
  %1226 = vmatmul.bf16.gmra.mxu0 %v1213
  %v1227 = vpop.f32.mrf.mxu0
  %v1228 = vadd.f32 0.0, %v1227
  %v1229 = vpop.f32.mrf.mxu0
  %1230 = vdwg.mxu0
  %1231 = vrot.lane.b32.xlu0 %v309, 96
  %v1232 = vpop.permute.xlu0 %1231
  %1233 = vrot.lane.b32.xlu0 %v309, 32
  %v1234 = vpop.permute.xlu0 %1233
  %v1236 = vsel %vm167, %v1232, 0
  %v1239 = vsel %vm167, %v1234, 0
  %1241 = vmatpush.bf16.xpose.msra.mxu0 0
  %1242 = vmatpush.bf16.xpose.msra.mxu0 0
  %1243 = vmatpush.bf16.xpose.msra.mxu0 0
  %1244 = vmatpush.bf16.xpose.msra.mxu0 0
  %1245 = vmatpush.bf16.xpose.msra.mxu0 0
  %1246 = vmatpush.bf16.xpose.msra.mxu0 0
  %1247 = vmatpush.bf16.xpose.msra.mxu0 0
  %1248 = vmatpush.bf16.xpose.msra.mxu0 %v1239
  %1249 = vmatmul.bf16.gmra.mxu0 %v1236
  %v1250 = vpop.f32.mrf.mxu0
  %v1251 = vadd.f32 0.0, %v1250
  %v1252 = vpop.f32.mrf.mxu0
  %1253 = vdwg.mxu0
  %1254 = vrot.lane.b32.xlu0 %v333, 96
  %v1255 = vpop.permute.xlu0 %1254
  %1256 = vrot.lane.b32.xlu0 %v333, 32
  %v1257 = vpop.permute.xlu0 %1256
  %v1259 = vsel %vm167, %v1255, 0
  %v1262 = vsel %vm167, %v1257, 0
  %1264 = vmatpush.bf16.xpose.msra.mxu0 0
  %1265 = vmatpush.bf16.xpose.msra.mxu0 0
  %1266 = vmatpush.bf16.xpose.msra.mxu0 0
  %1267 = vmatpush.bf16.xpose.msra.mxu0 0
  %1268 = vmatpush.bf16.xpose.msra.mxu0 0
  %1269 = vmatpush.bf16.xpose.msra.mxu0 0
  %1270 = vmatpush.bf16.xpose.msra.mxu0 0
  %1271 = vmatpush.bf16.xpose.msra.mxu0 %v1262
  %1272 = vmatmul.bf16.gmra.mxu0 %v1259
  %v1273 = vpop.f32.mrf.mxu0
  %v1274 = vadd.f32 0.0, %v1273
  %v1275 = vpop.f32.mrf.mxu0
  %1276 = vdwg.mxu0
  %v1277 = vmul.f32 %v1113, 0.25
  %v1278 = vmul.f32 %v1136, 0.25
  %v1279 = vmul.f32 %v1159, 0.25
  %v1280 = vmul.f32 %v1182, 0.25
  %v1281 = vmul.f32 %v1205, 0.25
  %v1282 = vmul.f32 %v1228, 0.25
  %v1283 = vmul.f32 %v1251, 0.25
  %v1284 = vmul.f32 %v1274, 0.25
  %v1285 = vsel %vm363, %v1277, -inf
  %1286 = vmax.xlane.f32.xlu0 %v1285
  %v1287 = vpop.xlane.xlu0 %1286
  %v1288 = vsel %vm363, %v1278, -inf
  %1289 = vmax.xlane.f32.xlu0 %v1288
  %v1290 = vpop.xlane.xlu0 %1289
  %v1291 = vsel %vm363, %v1279, -inf
  %1292 = vmax.xlane.f32.xlu0 %v1291
  %v1293 = vpop.xlane.xlu0 %1292
  %v1294 = vsel %vm363, %v1280, -inf
  %1295 = vmax.xlane.f32.xlu0 %v1294
  %v1296 = vpop.xlane.xlu0 %1295
  %v1297 = vsel %vm363, %v1281, -inf
  %1298 = vmax.xlane.f32.xlu0 %v1297
  %v1299 = vpop.xlane.xlu0 %1298
  %v1300 = vsel %vm363, %v1282, -inf
  %1301 = vmax.xlane.f32.xlu0 %v1300
  %v1302 = vpop.xlane.xlu0 %1301
  %v1303 = vsel %vm363, %v1283, -inf
  %1304 = vmax.xlane.f32.xlu0 %v1303
  %v1305 = vpop.xlane.xlu0 %1304
  %v1306 = vsel %vm363, %v1284, -inf
  %1307 = vmax.xlane.f32.xlu0 %v1306
  %v1308 = vpop.xlane.xlu0 %1307
  %v1309 = vsub.f32 %v1277, %v1287
  %v1310 = vsub.f32 %v1278, %v1290
  %v1311 = vsub.f32 %v1279, %v1293
  %v1312 = vsub.f32 %v1280, %v1296
  %v1313 = vsub.f32 %v1281, %v1299
  %v1314 = vsub.f32 %v1282, %v1302
  %v1315 = vsub.f32 %v1283, %v1305
  %v1316 = vsub.f32 %v1284, %v1308
  %v1317 = vmul.f32 %v1309, 1.442695
  %v1318 = vpow.pop %v1317
  %v1319 = vmul.f32 %v1310, 1.442695
  %v1320 = vpow.pop %v1319
  %v1321 = vmul.f32 %v1311, 1.442695
  %v1322 = vpow.pop %v1321
  %v1323 = vmul.f32 %v1312, 1.442695
  %v1324 = vpow.pop %v1323
  %v1325 = vmul.f32 %v1313, 1.442695
  %v1326 = vpow.pop %v1325
  %v1327 = vmul.f32 %v1314, 1.442695
  %v1328 = vpow.pop %v1327
  %v1329 = vmul.f32 %v1315, 1.442695
  %v1330 = vpow.pop %v1329
  %v1331 = vmul.f32 %v1316, 1.442695
  %v1332 = vpow.pop %v1331
  %v1333 = vsel %vm363, %v1318, 0.0
  %1334 = vadd.xlane.f32.xlu0 %v1333
  %v1335 = vpop.xlane.xlu0 %1334
  %v1336 = vsel %vm363, %v1320, 0.0
  %1337 = vadd.xlane.f32.xlu0 %v1336
  %v1338 = vpop.xlane.xlu0 %1337
  %v1339 = vsel %vm363, %v1322, 0.0
  %1340 = vadd.xlane.f32.xlu0 %v1339
  %v1341 = vpop.xlane.xlu0 %1340
  %v1342 = vsel %vm363, %v1324, 0.0
  %1343 = vadd.xlane.f32.xlu0 %v1342
  %v1344 = vpop.xlane.xlu0 %1343
  %v1345 = vsel %vm363, %v1326, 0.0
  %1346 = vadd.xlane.f32.xlu0 %v1345
  %v1347 = vpop.xlane.xlu0 %1346
  %v1348 = vsel %vm363, %v1328, 0.0
  %1349 = vadd.xlane.f32.xlu0 %v1348
  %v1350 = vpop.xlane.xlu0 %1349
  %v1351 = vsel %vm363, %v1330, 0.0
  %1352 = vadd.xlane.f32.xlu0 %v1351
  %v1353 = vpop.xlane.xlu0 %1352
  %v1354 = vsel %vm363, %v1332, 0.0
  %1355 = vadd.xlane.f32.xlu0 %v1354
  %v1356 = vpop.xlane.xlu0 %1355
  %v1357 = vrcp.pop %v1335
  %v1358 = vrcp.pop %v1338
  %v1359 = vrcp.pop %v1341
  %v1360 = vrcp.pop %v1344
  %v1361 = vrcp.pop %v1347
  %v1362 = vrcp.pop %v1350
  %v1363 = vrcp.pop %v1353
  %v1364 = vrcp.pop %v1356
  %v1365 = vmul.f32 %v1318, %v1357
  %v1366 = vmul.f32 %v1320, %v1358
  %v1367 = vmul.f32 %v1322, %v1359
  %v1368 = vmul.f32 %v1324, %v1360
  %v1369 = vmul.f32 %v1326, %v1361
  %v1370 = vmul.f32 %v1328, %v1362
  %v1371 = vmul.f32 %v1330, %v1363
  %v1372 = vmul.f32 %v1332, %v1364
  %v1373 = vpack.c.bf16 %v1365, %v1365
  %v1374 = vpack.c.bf16 %v1366, %v1366
  %v1375 = vpack.c.bf16 %v1367, %v1367
  %v1376 = vpack.c.bf16 %v1368, %v1368
  %v1377 = vpack.c.bf16 %v1369, %v1369
  %v1378 = vpack.c.bf16 %v1370, %v1370
  %v1379 = vpack.c.bf16 %v1371, %v1371
  %v1380 = vpack.c.bf16 %v1372, %v1372
  %1381 = vrot.lane.b32.xlu0 %v903, 96
  %v1382 = vpop.permute.xlu0 %1381
  %v1384 = vsel %vm363, %v1373, 0
  %v1387 = vsel %vm463, %v1382, 0
  %1389 = vmatpush.bf16.msra.mxu0 0
  %1390 = vmatpush.bf16.msra.mxu0 0
  %1391 = vmatpush.bf16.msra.mxu0 0
  %1392 = vmatpush.bf16.msra.mxu0 0
  %1393 = vmatpush.bf16.msra.mxu0 0
  %1394 = vmatpush.bf16.msra.mxu0 0
  %1395 = vmatpush.bf16.msra.mxu0 0
  %1396 = vmatpush.bf16.msra.mxu0 %v1387
  %1397 = vmatmul.bf16.gmra.mxu0 %v1384
  %v1398 = vpop.f32.mrf.mxu0
  %v1399 = vadd.f32 0.0, %v1398
  %v1400 = vpop.f32.mrf.mxu0
  %1401 = vdwg.mxu0
  %1402 = vrot.lane.b32.xlu0 %v927, 96
  %v1403 = vpop.permute.xlu0 %1402
  %v1405 = vsel %vm363, %v1374, 0
  %v1408 = vsel %vm463, %v1403, 0
  %1410 = vmatpush.bf16.msra.mxu0 0
  %1411 = vmatpush.bf16.msra.mxu0 0
  %1412 = vmatpush.bf16.msra.mxu0 0
  %1413 = vmatpush.bf16.msra.mxu0 0
  %1414 = vmatpush.bf16.msra.mxu0 0
  %1415 = vmatpush.bf16.msra.mxu0 0
  %1416 = vmatpush.bf16.msra.mxu0 0
  %1417 = vmatpush.bf16.msra.mxu0 %v1408
  %1418 = vmatmul.bf16.gmra.mxu0 %v1405
  %v1419 = vpop.f32.mrf.mxu0
  %v1420 = vadd.f32 0.0, %v1419
  %v1421 = vpop.f32.mrf.mxu0
  %1422 = vdwg.mxu0
  %1423 = vrot.lane.b32.xlu0 %v951, 96
  %v1424 = vpop.permute.xlu0 %1423
  %v1426 = vsel %vm363, %v1375, 0
  %v1429 = vsel %vm463, %v1424, 0
  %1431 = vmatpush.bf16.msra.mxu0 0
  %1432 = vmatpush.bf16.msra.mxu0 0
  %1433 = vmatpush.bf16.msra.mxu0 0
  %1434 = vmatpush.bf16.msra.mxu0 0
  %1435 = vmatpush.bf16.msra.mxu0 0
  %1436 = vmatpush.bf16.msra.mxu0 0
  %1437 = vmatpush.bf16.msra.mxu0 0
  %1438 = vmatpush.bf16.msra.mxu0 %v1429
  %1439 = vmatmul.bf16.gmra.mxu0 %v1426
  %v1440 = vpop.f32.mrf.mxu0
  %v1441 = vadd.f32 0.0, %v1440
  %v1442 = vpop.f32.mrf.mxu0
  %1443 = vdwg.mxu0
  %1444 = vrot.lane.b32.xlu0 %v975, 96
  %v1445 = vpop.permute.xlu0 %1444
  %v1447 = vsel %vm363, %v1376, 0
  %v1450 = vsel %vm463, %v1445, 0
  %1452 = vmatpush.bf16.msra.mxu0 0
  %1453 = vmatpush.bf16.msra.mxu0 0
  %1454 = vmatpush.bf16.msra.mxu0 0
  %1455 = vmatpush.bf16.msra.mxu0 0
  %1456 = vmatpush.bf16.msra.mxu0 0
  %1457 = vmatpush.bf16.msra.mxu0 0
  %1458 = vmatpush.bf16.msra.mxu0 0
  %1459 = vmatpush.bf16.msra.mxu0 %v1450
  %1460 = vmatmul.bf16.gmra.mxu0 %v1447
  %v1461 = vpop.f32.mrf.mxu0
  %v1462 = vadd.f32 0.0, %v1461
  %v1463 = vpop.f32.mrf.mxu0
  %1464 = vdwg.mxu0
  %1465 = vrot.lane.b32.xlu0 %v999, 96
  %v1466 = vpop.permute.xlu0 %1465
  %v1468 = vsel %vm363, %v1377, 0
  %v1471 = vsel %vm463, %v1466, 0
  %1473 = vmatpush.bf16.msra.mxu0 0
  %1474 = vmatpush.bf16.msra.mxu0 0
  %1475 = vmatpush.bf16.msra.mxu0 0
  %1476 = vmatpush.bf16.msra.mxu0 0
  %1477 = vmatpush.bf16.msra.mxu0 0
  %1478 = vmatpush.bf16.msra.mxu0 0
  %1479 = vmatpush.bf16.msra.mxu0 0
  %1480 = vmatpush.bf16.msra.mxu0 %v1471
  %1481 = vmatmul.bf16.gmra.mxu0 %v1468
  %v1482 = vpop.f32.mrf.mxu0
  %v1483 = vadd.f32 0.0, %v1482
  %v1484 = vpop.f32.mrf.mxu0
  %1485 = vdwg.mxu0
  %1486 = vrot.lane.b32.xlu0 %v1023, 96
  %v1487 = vpop.permute.xlu0 %1486
  %v1489 = vsel %vm363, %v1378, 0
  %v1492 = vsel %vm463, %v1487, 0
  %1494 = vmatpush.bf16.msra.mxu0 0
  %1495 = vmatpush.bf16.msra.mxu0 0
  %1496 = vmatpush.bf16.msra.mxu0 0
  %1497 = vmatpush.bf16.msra.mxu0 0
  %1498 = vmatpush.bf16.msra.mxu0 0
  %1499 = vmatpush.bf16.msra.mxu0 0
  %1500 = vmatpush.bf16.msra.mxu0 0
  %1501 = vmatpush.bf16.msra.mxu0 %v1492
  %1502 = vmatmul.bf16.gmra.mxu0 %v1489
  %v1503 = vpop.f32.mrf.mxu0
  %v1504 = vadd.f32 0.0, %v1503
  %v1505 = vpop.f32.mrf.mxu0
  %1506 = vdwg.mxu0
  %1507 = vrot.lane.b32.xlu0 %v1047, 96
  %v1508 = vpop.permute.xlu0 %1507
  %v1510 = vsel %vm363, %v1379, 0
  %v1513 = vsel %vm463, %v1508, 0
  %1515 = vmatpush.bf16.msra.mxu0 0
  %1516 = vmatpush.bf16.msra.mxu0 0
  %1517 = vmatpush.bf16.msra.mxu0 0
  %1518 = vmatpush.bf16.msra.mxu0 0
  %1519 = vmatpush.bf16.msra.mxu0 0
  %1520 = vmatpush.bf16.msra.mxu0 0
  %1521 = vmatpush.bf16.msra.mxu0 0
  %1522 = vmatpush.bf16.msra.mxu0 %v1513
  %1523 = vmatmul.bf16.gmra.mxu0 %v1510
  %v1524 = vpop.f32.mrf.mxu0
  %v1525 = vadd.f32 0.0, %v1524
  %v1526 = vpop.f32.mrf.mxu0
  %1527 = vdwg.mxu0
  %1528 = vrot.lane.b32.xlu0 %v1071, 96
  %v1529 = vpop.permute.xlu0 %1528
  %v1531 = vsel %vm363, %v1380, 0
  %v1534 = vsel %vm463, %v1529, 0
  %1536 = vmatpush.bf16.msra.mxu0 0
  %1537 = vmatpush.bf16.msra.mxu0 0
  %1538 = vmatpush.bf16.msra.mxu0 0
  %1539 = vmatpush.bf16.msra.mxu0 0
  %1540 = vmatpush.bf16.msra.mxu0 0
  %1541 = vmatpush.bf16.msra.mxu0 0
  %1542 = vmatpush.bf16.msra.mxu0 0
  %1543 = vmatpush.bf16.msra.mxu0 %v1534
  %1544 = vmatmul.bf16.gmra.mxu0 %v1531
  %v1545 = vpop.f32.mrf.mxu0
  %v1546 = vadd.f32 0.0, %v1545
  %v1547 = vpop.f32.mrf.mxu0
  %1548 = vdwg.mxu0
  %1549 = vrot.lane.b32.xlu0 %v164, 80
  %v1550 = vpop.permute.xlu0 %1549
  %1551 = vrot.lane.b32.xlu0 %v164, 16
  %v1552 = vpop.permute.xlu0 %1551
  %v1554 = vsel %vm167, %v1550, 0
  %v1557 = vsel %vm167, %v1552, 0
  %1559 = vmatpush.bf16.xpose.msra.mxu0 0
  %1560 = vmatpush.bf16.xpose.msra.mxu0 0
  %1561 = vmatpush.bf16.xpose.msra.mxu0 0
  %1562 = vmatpush.bf16.xpose.msra.mxu0 0
  %1563 = vmatpush.bf16.xpose.msra.mxu0 0
  %1564 = vmatpush.bf16.xpose.msra.mxu0 0
  %1565 = vmatpush.bf16.xpose.msra.mxu0 0
  %1566 = vmatpush.bf16.xpose.msra.mxu0 %v1557
  %1567 = vmatmul.bf16.gmra.mxu0 %v1554
  %v1568 = vpop.f32.mrf.mxu0
  %v1569 = vadd.f32 0.0, %v1568
  %v1570 = vpop.f32.mrf.mxu0
  %1571 = vdwg.mxu0
  %1572 = vrot.lane.b32.xlu0 %v189, 80
  %v1573 = vpop.permute.xlu0 %1572
  %1574 = vrot.lane.b32.xlu0 %v189, 16
  %v1575 = vpop.permute.xlu0 %1574
  %v1577 = vsel %vm167, %v1573, 0
  %v1580 = vsel %vm167, %v1575, 0
  %1582 = vmatpush.bf16.xpose.msra.mxu0 0
  %1583 = vmatpush.bf16.xpose.msra.mxu0 0
  %1584 = vmatpush.bf16.xpose.msra.mxu0 0
  %1585 = vmatpush.bf16.xpose.msra.mxu0 0
  %1586 = vmatpush.bf16.xpose.msra.mxu0 0
  %1587 = vmatpush.bf16.xpose.msra.mxu0 0
  %1588 = vmatpush.bf16.xpose.msra.mxu0 0
  %1589 = vmatpush.bf16.xpose.msra.mxu0 %v1580
  %1590 = vmatmul.bf16.gmra.mxu0 %v1577
  %v1591 = vpop.f32.mrf.mxu0
  %v1592 = vadd.f32 0.0, %v1591
  %v1593 = vpop.f32.mrf.mxu0
  %1594 = vdwg.mxu0
  %1595 = vrot.lane.b32.xlu0 %v213, 80
  %v1596 = vpop.permute.xlu0 %1595
  %1597 = vrot.lane.b32.xlu0 %v213, 16
  %v1598 = vpop.permute.xlu0 %1597
  %v1600 = vsel %vm167, %v1596, 0
  %v1603 = vsel %vm167, %v1598, 0
  %1605 = vmatpush.bf16.xpose.msra.mxu0 0
  %1606 = vmatpush.bf16.xpose.msra.mxu0 0
  %1607 = vmatpush.bf16.xpose.msra.mxu0 0
  %1608 = vmatpush.bf16.xpose.msra.mxu0 0
  %1609 = vmatpush.bf16.xpose.msra.mxu0 0
  %1610 = vmatpush.bf16.xpose.msra.mxu0 0
  %1611 = vmatpush.bf16.xpose.msra.mxu0 0
  %1612 = vmatpush.bf16.xpose.msra.mxu0 %v1603
  %1613 = vmatmul.bf16.gmra.mxu0 %v1600
  %v1614 = vpop.f32.mrf.mxu0
  %v1615 = vadd.f32 0.0, %v1614
  %v1616 = vpop.f32.mrf.mxu0
  %1617 = vdwg.mxu0
  %1618 = vrot.lane.b32.xlu0 %v237, 80
  %v1619 = vpop.permute.xlu0 %1618
  %1620 = vrot.lane.b32.xlu0 %v237, 16
  %v1621 = vpop.permute.xlu0 %1620
  %v1623 = vsel %vm167, %v1619, 0
  %v1626 = vsel %vm167, %v1621, 0
  %1628 = vmatpush.bf16.xpose.msra.mxu0 0
  %1629 = vmatpush.bf16.xpose.msra.mxu0 0
  %1630 = vmatpush.bf16.xpose.msra.mxu0 0
  %1631 = vmatpush.bf16.xpose.msra.mxu0 0
  %1632 = vmatpush.bf16.xpose.msra.mxu0 0
  %1633 = vmatpush.bf16.xpose.msra.mxu0 0
  %1634 = vmatpush.bf16.xpose.msra.mxu0 0
  %1635 = vmatpush.bf16.xpose.msra.mxu0 %v1626
  %1636 = vmatmul.bf16.gmra.mxu0 %v1623
  %v1637 = vpop.f32.mrf.mxu0
  %v1638 = vadd.f32 0.0, %v1637
  %v1639 = vpop.f32.mrf.mxu0
  %1640 = vdwg.mxu0
  %1641 = vrot.lane.b32.xlu0 %v261, 80
  %v1642 = vpop.permute.xlu0 %1641
  %1643 = vrot.lane.b32.xlu0 %v261, 16
  %v1644 = vpop.permute.xlu0 %1643
  %v1646 = vsel %vm167, %v1642, 0
  %v1649 = vsel %vm167, %v1644, 0
  %1651 = vmatpush.bf16.xpose.msra.mxu0 0
  %1652 = vmatpush.bf16.xpose.msra.mxu0 0
  %1653 = vmatpush.bf16.xpose.msra.mxu0 0
  %1654 = vmatpush.bf16.xpose.msra.mxu0 0
  %1655 = vmatpush.bf16.xpose.msra.mxu0 0
  %1656 = vmatpush.bf16.xpose.msra.mxu0 0
  %1657 = vmatpush.bf16.xpose.msra.mxu0 0
  %1658 = vmatpush.bf16.xpose.msra.mxu0 %v1649
  %1659 = vmatmul.bf16.gmra.mxu0 %v1646
  %v1660 = vpop.f32.mrf.mxu0
  %v1661 = vadd.f32 0.0, %v1660
  %v1662 = vpop.f32.mrf.mxu0
  %1663 = vdwg.mxu0
  %1664 = vrot.lane.b32.xlu0 %v285, 80
  %v1665 = vpop.permute.xlu0 %1664
  %1666 = vrot.lane.b32.xlu0 %v285, 16
  %v1667 = vpop.permute.xlu0 %1666
  %v1669 = vsel %vm167, %v1665, 0
  %v1672 = vsel %vm167, %v1667, 0
  %1674 = vmatpush.bf16.xpose.msra.mxu0 0
  %1675 = vmatpush.bf16.xpose.msra.mxu0 0
  %1676 = vmatpush.bf16.xpose.msra.mxu0 0
  %1677 = vmatpush.bf16.xpose.msra.mxu0 0
  %1678 = vmatpush.bf16.xpose.msra.mxu0 0
  %1679 = vmatpush.bf16.xpose.msra.mxu0 0
  %1680 = vmatpush.bf16.xpose.msra.mxu0 0
  %1681 = vmatpush.bf16.xpose.msra.mxu0 %v1672
  %1682 = vmatmul.bf16.gmra.mxu0 %v1669
  %v1683 = vpop.f32.mrf.mxu0
  %v1684 = vadd.f32 0.0, %v1683
  %v1685 = vpop.f32.mrf.mxu0
  %1686 = vdwg.mxu0
  %1687 = vrot.lane.b32.xlu0 %v309, 80
  %v1688 = vpop.permute.xlu0 %1687
  %1689 = vrot.lane.b32.xlu0 %v309, 16
  %v1690 = vpop.permute.xlu0 %1689
  %v1692 = vsel %vm167, %v1688, 0
  %v1695 = vsel %vm167, %v1690, 0
  %1697 = vmatpush.bf16.xpose.msra.mxu0 0
  %1698 = vmatpush.bf16.xpose.msra.mxu0 0
  %1699 = vmatpush.bf16.xpose.msra.mxu0 0
  %1700 = vmatpush.bf16.xpose.msra.mxu0 0
  %1701 = vmatpush.bf16.xpose.msra.mxu0 0
  %1702 = vmatpush.bf16.xpose.msra.mxu0 0
  %1703 = vmatpush.bf16.xpose.msra.mxu0 0
  %1704 = vmatpush.bf16.xpose.msra.mxu0 %v1695
  %1705 = vmatmul.bf16.gmra.mxu0 %v1692
  %v1706 = vpop.f32.mrf.mxu0
  %v1707 = vadd.f32 0.0, %v1706
  %v1708 = vpop.f32.mrf.mxu0
  %1709 = vdwg.mxu0
  %1710 = vrot.lane.b32.xlu0 %v333, 80
  %v1711 = vpop.permute.xlu0 %1710
  %1712 = vrot.lane.b32.xlu0 %v333, 16
  %v1713 = vpop.permute.xlu0 %1712
  %v1715 = vsel %vm167, %v1711, 0
  %v1718 = vsel %vm167, %v1713, 0
  %1720 = vmatpush.bf16.xpose.msra.mxu0 0
  %1721 = vmatpush.bf16.xpose.msra.mxu0 0
  %1722 = vmatpush.bf16.xpose.msra.mxu0 0
  %1723 = vmatpush.bf16.xpose.msra.mxu0 0
  %1724 = vmatpush.bf16.xpose.msra.mxu0 0
  %1725 = vmatpush.bf16.xpose.msra.mxu0 0
  %1726 = vmatpush.bf16.xpose.msra.mxu0 0
  %1727 = vmatpush.bf16.xpose.msra.mxu0 %v1718
  %1728 = vmatmul.bf16.gmra.mxu0 %v1715
  %v1729 = vpop.f32.mrf.mxu0
  %v1730 = vadd.f32 0.0, %v1729
  %v1731 = vpop.f32.mrf.mxu0
  %1732 = vdwg.mxu0
  %v1733 = vmul.f32 %v1569, 0.25
  %v1734 = vmul.f32 %v1592, 0.25
  %v1735 = vmul.f32 %v1615, 0.25
  %v1736 = vmul.f32 %v1638, 0.25
  %v1737 = vmul.f32 %v1661, 0.25
  %v1738 = vmul.f32 %v1684, 0.25
  %v1739 = vmul.f32 %v1707, 0.25
  %v1740 = vmul.f32 %v1730, 0.25
  %v1741 = vsel %vm363, %v1733, -inf
  %1742 = vmax.xlane.f32.xlu0 %v1741
  %v1743 = vpop.xlane.xlu0 %1742
  %v1744 = vsel %vm363, %v1734, -inf
  %1745 = vmax.xlane.f32.xlu0 %v1744
  %v1746 = vpop.xlane.xlu0 %1745
  %v1747 = vsel %vm363, %v1735, -inf
  %1748 = vmax.xlane.f32.xlu0 %v1747
  %v1749 = vpop.xlane.xlu0 %1748
  %v1750 = vsel %vm363, %v1736, -inf
  %1751 = vmax.xlane.f32.xlu0 %v1750
  %v1752 = vpop.xlane.xlu0 %1751
  %v1753 = vsel %vm363, %v1737, -inf
  %1754 = vmax.xlane.f32.xlu0 %v1753
  %v1755 = vpop.xlane.xlu0 %1754
  %v1756 = vsel %vm363, %v1738, -inf
  %1757 = vmax.xlane.f32.xlu0 %v1756
  %v1758 = vpop.xlane.xlu0 %1757
  %v1759 = vsel %vm363, %v1739, -inf
  %1760 = vmax.xlane.f32.xlu0 %v1759
  %v1761 = vpop.xlane.xlu0 %1760
  %v1762 = vsel %vm363, %v1740, -inf
  %1763 = vmax.xlane.f32.xlu0 %v1762
  %v1764 = vpop.xlane.xlu0 %1763
  %v1765 = vsub.f32 %v1733, %v1743
  %v1766 = vsub.f32 %v1734, %v1746
  %v1767 = vsub.f32 %v1735, %v1749
  %v1768 = vsub.f32 %v1736, %v1752
  %v1769 = vsub.f32 %v1737, %v1755
  %v1770 = vsub.f32 %v1738, %v1758
  %v1771 = vsub.f32 %v1739, %v1761
  %v1772 = vsub.f32 %v1740, %v1764
  %v1773 = vmul.f32 %v1765, 1.442695
  %v1774 = vpow.pop %v1773
  %v1775 = vmul.f32 %v1766, 1.442695
  %v1776 = vpow.pop %v1775
  %v1777 = vmul.f32 %v1767, 1.442695
  %v1778 = vpow.pop %v1777
  %v1779 = vmul.f32 %v1768, 1.442695
  %v1780 = vpow.pop %v1779
  %v1781 = vmul.f32 %v1769, 1.442695
  %v1782 = vpow.pop %v1781
  %v1783 = vmul.f32 %v1770, 1.442695
  %v1784 = vpow.pop %v1783
  %v1785 = vmul.f32 %v1771, 1.442695
  %v1786 = vpow.pop %v1785
  %v1787 = vmul.f32 %v1772, 1.442695
  %v1788 = vpow.pop %v1787
  %v1789 = vsel %vm363, %v1774, 0.0
  %1790 = vadd.xlane.f32.xlu0 %v1789
  %v1791 = vpop.xlane.xlu0 %1790
  %v1792 = vsel %vm363, %v1776, 0.0
  %1793 = vadd.xlane.f32.xlu0 %v1792
  %v1794 = vpop.xlane.xlu0 %1793
  %v1795 = vsel %vm363, %v1778, 0.0
  %1796 = vadd.xlane.f32.xlu0 %v1795
  %v1797 = vpop.xlane.xlu0 %1796
  %v1798 = vsel %vm363, %v1780, 0.0
  %1799 = vadd.xlane.f32.xlu0 %v1798
  %v1800 = vpop.xlane.xlu0 %1799
  %v1801 = vsel %vm363, %v1782, 0.0
  %1802 = vadd.xlane.f32.xlu0 %v1801
  %v1803 = vpop.xlane.xlu0 %1802
  %v1804 = vsel %vm363, %v1784, 0.0
  %1805 = vadd.xlane.f32.xlu0 %v1804
  %v1806 = vpop.xlane.xlu0 %1805
  %v1807 = vsel %vm363, %v1786, 0.0
  %1808 = vadd.xlane.f32.xlu0 %v1807
  %v1809 = vpop.xlane.xlu0 %1808
  %v1810 = vsel %vm363, %v1788, 0.0
  %1811 = vadd.xlane.f32.xlu0 %v1810
  %v1812 = vpop.xlane.xlu0 %1811
  %v1813 = vrcp.pop %v1791
  %v1814 = vrcp.pop %v1794
  %v1815 = vrcp.pop %v1797
  %v1816 = vrcp.pop %v1800
  %v1817 = vrcp.pop %v1803
  %v1818 = vrcp.pop %v1806
  %v1819 = vrcp.pop %v1809
  %v1820 = vrcp.pop %v1812
  %v1821 = vmul.f32 %v1774, %v1813
  %v1822 = vmul.f32 %v1776, %v1814
  %v1823 = vmul.f32 %v1778, %v1815
  %v1824 = vmul.f32 %v1780, %v1816
  %v1825 = vmul.f32 %v1782, %v1817
  %v1826 = vmul.f32 %v1784, %v1818
  %v1827 = vmul.f32 %v1786, %v1819
  %v1828 = vmul.f32 %v1788, %v1820
  %v1829 = vpack.c.bf16 %v1821, %v1821
  %v1830 = vpack.c.bf16 %v1822, %v1822
  %v1831 = vpack.c.bf16 %v1823, %v1823
  %v1832 = vpack.c.bf16 %v1824, %v1824
  %v1833 = vpack.c.bf16 %v1825, %v1825
  %v1834 = vpack.c.bf16 %v1826, %v1826
  %v1835 = vpack.c.bf16 %v1827, %v1827
  %v1836 = vpack.c.bf16 %v1828, %v1828
  %1837 = vrot.lane.b32.xlu0 %v903, 80
  %v1838 = vpop.permute.xlu0 %1837
  %v1840 = vsel %vm363, %v1829, 0
  %v1843 = vsel %vm463, %v1838, 0
  %1845 = vmatpush.bf16.msra.mxu0 0
  %1846 = vmatpush.bf16.msra.mxu0 0
  %1847 = vmatpush.bf16.msra.mxu0 0
  %1848 = vmatpush.bf16.msra.mxu0 0
  %1849 = vmatpush.bf16.msra.mxu0 0
  %1850 = vmatpush.bf16.msra.mxu0 0
  %1851 = vmatpush.bf16.msra.mxu0 0
  %1852 = vmatpush.bf16.msra.mxu0 %v1843
  %1853 = vmatmul.bf16.gmra.mxu0 %v1840
  %v1854 = vpop.f32.mrf.mxu0
  %v1855 = vadd.f32 0.0, %v1854
  %v1856 = vpop.f32.mrf.mxu0
  %1857 = vdwg.mxu0
  %1858 = vrot.lane.b32.xlu0 %v927, 80
  %v1859 = vpop.permute.xlu0 %1858
  %v1861 = vsel %vm363, %v1830, 0
  %v1864 = vsel %vm463, %v1859, 0
  %1866 = vmatpush.bf16.msra.mxu0 0
  %1867 = vmatpush.bf16.msra.mxu0 0
  %1868 = vmatpush.bf16.msra.mxu0 0
  %1869 = vmatpush.bf16.msra.mxu0 0
  %1870 = vmatpush.bf16.msra.mxu0 0
  %1871 = vmatpush.bf16.msra.mxu0 0
  %1872 = vmatpush.bf16.msra.mxu0 0
  %1873 = vmatpush.bf16.msra.mxu0 %v1864
  %1874 = vmatmul.bf16.gmra.mxu0 %v1861
  %v1875 = vpop.f32.mrf.mxu0
  %v1876 = vadd.f32 0.0, %v1875
  %v1877 = vpop.f32.mrf.mxu0
  %1878 = vdwg.mxu0
  %1879 = vrot.lane.b32.xlu0 %v951, 80
  %v1880 = vpop.permute.xlu0 %1879
  %v1882 = vsel %vm363, %v1831, 0
  %v1885 = vsel %vm463, %v1880, 0
  %1887 = vmatpush.bf16.msra.mxu0 0
  %1888 = vmatpush.bf16.msra.mxu0 0
  %1889 = vmatpush.bf16.msra.mxu0 0
  %1890 = vmatpush.bf16.msra.mxu0 0
  %1891 = vmatpush.bf16.msra.mxu0 0
  %1892 = vmatpush.bf16.msra.mxu0 0
  %1893 = vmatpush.bf16.msra.mxu0 0
  %1894 = vmatpush.bf16.msra.mxu0 %v1885
  %1895 = vmatmul.bf16.gmra.mxu0 %v1882
  %v1896 = vpop.f32.mrf.mxu0
  %v1897 = vadd.f32 0.0, %v1896
  %v1898 = vpop.f32.mrf.mxu0
  %1899 = vdwg.mxu0
  %1900 = vrot.lane.b32.xlu0 %v975, 80
  %v1901 = vpop.permute.xlu0 %1900
  %v1903 = vsel %vm363, %v1832, 0
  %v1906 = vsel %vm463, %v1901, 0
  %1908 = vmatpush.bf16.msra.mxu0 0
  %1909 = vmatpush.bf16.msra.mxu0 0
  %1910 = vmatpush.bf16.msra.mxu0 0
  %1911 = vmatpush.bf16.msra.mxu0 0
  %1912 = vmatpush.bf16.msra.mxu0 0
  %1913 = vmatpush.bf16.msra.mxu0 0
  %1914 = vmatpush.bf16.msra.mxu0 0
  %1915 = vmatpush.bf16.msra.mxu0 %v1906
  %1916 = vmatmul.bf16.gmra.mxu0 %v1903
  %v1917 = vpop.f32.mrf.mxu0
  %v1918 = vadd.f32 0.0, %v1917
  %v1919 = vpop.f32.mrf.mxu0
  %1920 = vdwg.mxu0
  %1921 = vrot.lane.b32.xlu0 %v999, 80
  %v1922 = vpop.permute.xlu0 %1921
  %v1924 = vsel %vm363, %v1833, 0
  %v1927 = vsel %vm463, %v1922, 0
  %1929 = vmatpush.bf16.msra.mxu0 0
  %1930 = vmatpush.bf16.msra.mxu0 0
  %1931 = vmatpush.bf16.msra.mxu0 0
  %1932 = vmatpush.bf16.msra.mxu0 0
  %1933 = vmatpush.bf16.msra.mxu0 0
  %1934 = vmatpush.bf16.msra.mxu0 0
  %1935 = vmatpush.bf16.msra.mxu0 0
  %1936 = vmatpush.bf16.msra.mxu0 %v1927
  %1937 = vmatmul.bf16.gmra.mxu0 %v1924
  %v1938 = vpop.f32.mrf.mxu0
  %v1939 = vadd.f32 0.0, %v1938
  %v1940 = vpop.f32.mrf.mxu0
  %1941 = vdwg.mxu0
  %1942 = vrot.lane.b32.xlu0 %v1023, 80
  %v1943 = vpop.permute.xlu0 %1942
  %v1945 = vsel %vm363, %v1834, 0
  %v1948 = vsel %vm463, %v1943, 0
  %1950 = vmatpush.bf16.msra.mxu0 0
  %1951 = vmatpush.bf16.msra.mxu0 0
  %1952 = vmatpush.bf16.msra.mxu0 0
  %1953 = vmatpush.bf16.msra.mxu0 0
  %1954 = vmatpush.bf16.msra.mxu0 0
  %1955 = vmatpush.bf16.msra.mxu0 0
  %1956 = vmatpush.bf16.msra.mxu0 0
  %1957 = vmatpush.bf16.msra.mxu0 %v1948
  %1958 = vmatmul.bf16.gmra.mxu0 %v1945
  %v1959 = vpop.f32.mrf.mxu0
  %v1960 = vadd.f32 0.0, %v1959
  %v1961 = vpop.f32.mrf.mxu0
  %1962 = vdwg.mxu0
  %1963 = vrot.lane.b32.xlu0 %v1047, 80
  %v1964 = vpop.permute.xlu0 %1963
  %v1966 = vsel %vm363, %v1835, 0
  %v1969 = vsel %vm463, %v1964, 0
  %1971 = vmatpush.bf16.msra.mxu0 0
  %1972 = vmatpush.bf16.msra.mxu0 0
  %1973 = vmatpush.bf16.msra.mxu0 0
  %1974 = vmatpush.bf16.msra.mxu0 0
  %1975 = vmatpush.bf16.msra.mxu0 0
  %1976 = vmatpush.bf16.msra.mxu0 0
  %1977 = vmatpush.bf16.msra.mxu0 0
  %1978 = vmatpush.bf16.msra.mxu0 %v1969
  %1979 = vmatmul.bf16.gmra.mxu0 %v1966
  %v1980 = vpop.f32.mrf.mxu0
  %v1981 = vadd.f32 0.0, %v1980
  %v1982 = vpop.f32.mrf.mxu0
  %1983 = vdwg.mxu0
  %1984 = vrot.lane.b32.xlu0 %v1071, 80
  %v1985 = vpop.permute.xlu0 %1984
  %v1987 = vsel %vm363, %v1836, 0
  %v1990 = vsel %vm463, %v1985, 0
  %1992 = vmatpush.bf16.msra.mxu0 0
  %1993 = vmatpush.bf16.msra.mxu0 0
  %1994 = vmatpush.bf16.msra.mxu0 0
  %1995 = vmatpush.bf16.msra.mxu0 0
  %1996 = vmatpush.bf16.msra.mxu0 0
  %1997 = vmatpush.bf16.msra.mxu0 0
  %1998 = vmatpush.bf16.msra.mxu0 0
  %1999 = vmatpush.bf16.msra.mxu0 %v1990
  %2000 = vmatmul.bf16.gmra.mxu0 %v1987
  %v2001 = vpop.f32.mrf.mxu0
  %v2002 = vadd.f32 0.0, %v2001
  %v2003 = vpop.f32.mrf.mxu0
  %2004 = vdwg.mxu0
  %2013 = vrot.lane.b32.xlu0 %v922, 16
  %v2014 = vpop.permute.xlu0 %2013
  %2015 = vrot.lane.b32.xlu0 %v946, 16
  %v2016 = vpop.permute.xlu0 %2015
  %2017 = vrot.lane.b32.xlu0 %v970, 16
  %v2018 = vpop.permute.xlu0 %2017
  %2019 = vrot.lane.b32.xlu0 %v994, 16
  %v2020 = vpop.permute.xlu0 %2019
  %2021 = vrot.lane.b32.xlu0 %v1018, 16
  %v2022 = vpop.permute.xlu0 %2021
  %2023 = vrot.lane.b32.xlu0 %v1042, 16
  %v2024 = vpop.permute.xlu0 %2023
  %2025 = vrot.lane.b32.xlu0 %v1066, 16
  %v2026 = vpop.permute.xlu0 %2025
  %2027 = vrot.lane.b32.xlu0 %v1090, 16
  %v2028 = vpop.permute.xlu0 %2027
  %2045 = vrot.lane.b32.xlu0 %v1399, 32
  %v2046 = vpop.permute.xlu0 %2045
  %2047 = vrot.lane.b32.xlu0 %v1420, 32
  %v2048 = vpop.permute.xlu0 %2047
  %2049 = vrot.lane.b32.xlu0 %v1441, 32
  %v2050 = vpop.permute.xlu0 %2049
  %2051 = vrot.lane.b32.xlu0 %v1462, 32
  %v2052 = vpop.permute.xlu0 %2051
  %2053 = vrot.lane.b32.xlu0 %v1483, 32
  %v2054 = vpop.permute.xlu0 %2053
  %2055 = vrot.lane.b32.xlu0 %v1504, 32
  %v2056 = vpop.permute.xlu0 %2055
  %2057 = vrot.lane.b32.xlu0 %v1525, 32
  %v2058 = vpop.permute.xlu0 %2057
  %2059 = vrot.lane.b32.xlu0 %v1546, 32
  %v2060 = vpop.permute.xlu0 %2059
  %2077 = vrot.lane.b32.xlu0 %v1855, 48
  %v2078 = vpop.permute.xlu0 %2077
  %2079 = vrot.lane.b32.xlu0 %v1876, 48
  %v2080 = vpop.permute.xlu0 %2079
  %2081 = vrot.lane.b32.xlu0 %v1897, 48
  %v2082 = vpop.permute.xlu0 %2081
  %2083 = vrot.lane.b32.xlu0 %v1918, 48
  %v2084 = vpop.permute.xlu0 %2083
  %2085 = vrot.lane.b32.xlu0 %v1939, 48
  %v2086 = vpop.permute.xlu0 %2085
  %2087 = vrot.lane.b32.xlu0 %v1960, 48
  %v2088 = vpop.permute.xlu0 %2087
  %2089 = vrot.lane.b32.xlu0 %v1981, 48
  %v2090 = vpop.permute.xlu0 %2089
  %2091 = vrot.lane.b32.xlu0 %v2002, 48
  %v2092 = vpop.permute.xlu0 %2091
  %v2101 = vsel %vm167, %v477, %v2014
  %v2102 = vsel %vm167, %v496, %v2016
  %v2103 = vsel %vm167, %v515, %v2018
  %v2104 = vsel %vm167, %v534, %v2020
  %v2105 = vsel %vm167, %v553, %v2022
  %v2106 = vsel %vm167, %v572, %v2024
  %v2107 = vsel %vm167, %v591, %v2026
  %v2108 = vsel %vm167, %v610, %v2028
  %v2109 = vsel %vm75, %v2101, %v2046
  %v2110 = vsel %vm75, %v2102, %v2048
  %v2111 = vsel %vm75, %v2103, %v2050
  %v2112 = vsel %vm75, %v2104, %v2052
  %v2113 = vsel %vm75, %v2105, %v2054
  %v2114 = vsel %vm75, %v2106, %v2056
  %v2115 = vsel %vm75, %v2107, %v2058
  %v2116 = vsel %vm75, %v2108, %v2060
  %vm2117 = vcmask 392192
  %v2118 = vsel %vm2117, %v2109, %v2078
  %v2119 = vsel %vm2117, %v2110, %v2080
  %v2120 = vsel %vm2117, %v2111, %v2082
  %v2121 = vsel %vm2117, %v2112, %v2084
  %v2122 = vsel %vm2117, %v2113, %v2086
  %v2123 = vsel %vm2117, %v2114, %v2088
  %v2124 = vsel %vm2117, %v2115, %v2090
  %v2125 = vsel %vm2117, %v2116, %v2092
  %v2126 = vpack.c.bf16 %v2119, %v2118
  %v2127 = vpack.c.bf16 %v2121, %v2120
  %v2128 = vpack.c.bf16 %v2123, %v2122
  %v2129 = vpack.c.bf16 %v2125, %v2124
  %v2138 = vunpack.c.l.b16 %v27
  %v2139 = vunpack.c.l.b16 %v28
  %v2140 = vunpack.c.l.b16 %v29
  %v2141 = vunpack.c.l.b16 %v30
  %v2142 = vunpack.c.l.b16 %v31
  %v2143 = vunpack.c.l.b16 %v32
  %v2144 = vunpack.c.l.b16 %v33
  %v2145 = vunpack.c.l.b16 %v34
  %v2146 = vpack.c.b16 %v2139, %v2138
  %v2147 = vpack.c.b16 %v2141, %v2140
  %v2148 = vpack.c.b16 %v2143, %v2142
  %v2149 = vpack.c.b16 %v2145, %v2144
  %vm2154 = vcmask 523264
  %v2156 = vsel %vm2154, %v2126, 0
  %v2159 = vsel %vm2154, %v2127, 0
  %v2162 = vsel %vm2154, %v2128, 0
  %v2165 = vsel %vm2154, %v2129, 0
  %2167 = vmatpush.bf16.msra.mxu0 0
  %2168 = vmatpush.bf16.msra.mxu0 0
  %2169 = vmatpush.bf16.msra.mxu0 0
  %2170 = vmatpush.bf16.msra.mxu0 0
  %2171 = vmatpush.bf16.msra.mxu0 %v2149
  %2172 = vmatpush.bf16.msra.mxu0 %v2148
  %2173 = vmatpush.bf16.msra.mxu0 %v2147
  %2174 = vmatpush.bf16.msra.mxu0 %v2146
  %2175 = vmatmul.bf16.gmra.mxu0 %v2156
  %v2176 = vpop.f32.mrf.mxu0
  %v2177 = vadd.f32 0.0, %v2176
  %v2178 = vpop.f32.mrf.mxu0
  %v2179 = vadd.f32 0.0, %v2178
  %2180 = vmatmul.bf16.gmra.mxu0 %v2159
  %v2181 = vpop.f32.mrf.mxu0
  %v2182 = vadd.f32 0.0, %v2181
  %v2183 = vpop.f32.mrf.mxu0
  %v2184 = vadd.f32 0.0, %v2183
  %2185 = vmatmul.bf16.gmra.mxu0 %v2162
  %v2186 = vpop.f32.mrf.mxu0
  %v2187 = vadd.f32 0.0, %v2186
  %v2188 = vpop.f32.mrf.mxu0
  %v2189 = vadd.f32 0.0, %v2188
  %2190 = vmatmul.bf16.gmra.mxu0 %v2165
  %v2191 = vpop.f32.mrf.mxu0
  %v2192 = vadd.f32 0.0, %v2191
  %v2193 = vpop.f32.mrf.mxu0
  %v2194 = vadd.f32 0.0, %v2193
  %2195 = vdwg.mxu0
  %2196 = vst.msk [vmem:[%s3] sm:$0xff] %vm75, %v2177
  %2197 = vst.msk [vmem:[%s3 + $0x8] sm:$0xff] %vm75, %v2179
  %2198 = vst.msk [vmem:[%s3 + $0x10] sm:$0xff] %vm75, %v2182
  %2199 = vst.msk [vmem:[%s3 + $0x18] sm:$0xff] %vm75, %v2184
  %2200 = vst.msk [vmem:[%s3 + $0x20] sm:$0xff] %vm75, %v2187
  %2201 = vst.msk [vmem:[%s3 + $0x28] sm:$0xff] %vm75, %v2189
  %2202 = vst.msk [vmem:[%s3 + $0x30] sm:$0xff] %vm75, %v2192
  %2203 = vst.msk [vmem:[%s3 + $0x38] sm:$0xff] %vm75, %v2194
  // Predicated region
  $region14: #{tpu_custom_call.1} parent=0 // pred_check
    _
  $region15: #{tpu_custom_call.1} parent=0 // pred_check_branch
    %2205 = sbr.rel (0) target = $region17
  $region16: #{tpu_custom_call.1} parent=0 // pred_region
    _
  $region17: #{tpu_custom_call.1} parent=0 // pred_fallthru
    _
  // Predicated region
  $region18: #{tpu_custom_call.1} parent=0 // pred_check
    _
  $region19: #{tpu_custom_call.1} parent=0 // pred_check_branch
    %2207 = sbr.rel (0) target = $region21
  $region20: #{tpu_custom_call.1} parent=0 // pred_region
    _
  $region21: #{tpu_custom_call.1} parent=0 // pred_fallthru
    _

</llo_original>
